<compile_context>
chip_gen: v6e
topology: v6e:2x2x1
jax: 0.10.0
libtpu: 0.0.40
codegen_flags: <defaults>
</compile_context>

<pallas_src>
import functools
import math

import jax
import jax.numpy as jnp
from jax.experimental import pallas as pl
from jax.experimental.pallas import tpu as pltpu

_TILE_M = 256                       # row tile for all token-major linears
_VMEM_LIMIT = 64 * 1024 * 1024      # raise scoped-VMEM default (16/32 MiB)
_LN_EPS = 1e-12                     # BERT LayerNorm eps


# ----------------------------------------------------------------------------
# Pallas kernels
# ----------------------------------------------------------------------------
def _fused_linear_kernel(x_ref, w_ref, b_ref, *rest, activation, has_residual,
                         ln_eps):
    """o = [LN]( act(x @ w + b) [+ residual] ).  bf16 MXU, f32 accumulate."""
    n_res = 1 if has_residual else 0
    res_ref = rest[0] if has_residual else None
    if ln_eps is not None:
        g_ref, beta_ref = rest[n_res], rest[n_res + 1]
        o_ref = rest[n_res + 2]
    else:
        g_ref = beta_ref = None
        o_ref = rest[n_res]

    x = x_ref[...].astype(jnp.bfloat16)
    w = w_ref[...].astype(jnp.bfloat16)
    y = jnp.dot(x, w, preferred_element_type=jnp.float32) + b_ref[...]

    if activation == "gelu":
        # tanh-approximate GELU; exact erf-GELU differs by <1e-3 for inference.
        c = math.sqrt(2.0 / math.pi)
        y = 0.5 * y * (1.0 + jnp.tanh(c * (y + 0.044715 * y * y * y)))
    elif activation == "tanh":
        y = jnp.tanh(y)

    if res_ref is not None:
        y = y + res_ref[...]

    if ln_eps is not None:
        mu = jnp.mean(y, axis=-1, keepdims=True)
        var = jnp.mean((y - mu) * (y - mu), axis=-1, keepdims=True)
        y = (y - mu) * jax.lax.rsqrt(var + ln_eps) * g_ref[...] + beta_ref[...]

    o_ref[...] = y.astype(o_ref.dtype)


def fused_linear(x, w, b, *, residual=None, ln=None, activation="none",
                 tile_m=_TILE_M):
    """Row-tiled fused linear.  x:(M,K) f32, w:(K,N), b:(N,).  ln=(g,b,eps)."""
    M, K = x.shape
    N = w.shape[1]
    tm = min(tile_m, M)

    args = [x, w.astype(jnp.bfloat16), b.reshape(1, N).astype(jnp.float32)]
    in_specs = [
        pl.BlockSpec((tm, K), lambda i: (i, 0)),
        pl.BlockSpec((K, N), lambda i: (0, 0)),   # weight stays resident
        pl.BlockSpec((1, N), lambda i: (0, 0)),
    ]
    if residual is not None:
        args.append(residual)
        in_specs.append(pl.BlockSpec((tm, N), lambda i: (i, 0)))
    ln_eps = None
    if ln is not None:
        g, beta, ln_eps = ln
        args += [g.reshape(1, N), beta.reshape(1, N)]
        in_specs += [pl.BlockSpec((1, N), lambda i: (0, 0)),
                     pl.BlockSpec((1, N), lambda i: (0, 0))]

    return pl.pallas_call(
        functools.partial(_fused_linear_kernel, activation=activation,
                          has_residual=residual is not None, ln_eps=ln_eps),
        out_shape=jax.ShapeDtypeStruct((M, N), jnp.float32),
        grid=(pl.cdiv(M, tm),),
        in_specs=in_specs,
        out_specs=pl.BlockSpec((tm, N), lambda i: (i, 0)),
        compiler_params=pltpu.CompilerParams(
            dimension_semantics=("parallel",),
            vmem_limit_bytes=_VMEM_LIMIT),
    )(*args)


def _add_ln_kernel(x_ref, r_ref, g_ref, b_ref, o_ref, *, eps):
    y = x_ref[...] + r_ref[...]
    mu = jnp.mean(y, axis=-1, keepdims=True)
    var = jnp.mean((y - mu) * (y - mu), axis=-1, keepdims=True)
    o_ref[...] = ((y - mu) * jax.lax.rsqrt(var + eps) * g_ref[...]
                  + b_ref[...]).astype(o_ref.dtype)


def add_layernorm(x, r, gamma, beta, eps=_LN_EPS, tile_m=_TILE_M):
    """LN(x + r), row-tiled.  Used only on the no-modality embedding path."""
    M, H = x.shape
    tm = min(tile_m, M)
    return pl.pallas_call(
        functools.partial(_add_ln_kernel, eps=eps),
        out_shape=jax.ShapeDtypeStruct((M, H), jnp.float32),
        grid=(pl.cdiv(M, tm),),
        in_specs=[
            pl.BlockSpec((tm, H), lambda i: (i, 0)),
            pl.BlockSpec((tm, H), lambda i: (i, 0)),
            pl.BlockSpec((1, H), lambda i: (0, 0)),
            pl.BlockSpec((1, H), lambda i: (0, 0)),
        ],
        out_specs=pl.BlockSpec((tm, H), lambda i: (i, 0)),
        compiler_params=pltpu.CompilerParams(
            dimension_semantics=("parallel",),
            vmem_limit_bytes=_VMEM_LIMIT),
    )(x, r, gamma.reshape(1, H), beta.reshape(1, H))


def _attn_kernel(q_ref, k_ref, v_ref, m_ref, o_ref):
    # q/k/v refs: (nH, S, dH) for the current batch element.  1/sqrt(dH) is
    # already folded into q.  m_ref: (1, S) additive mask.
    q = q_ref[...].astype(jnp.bfloat16)
    k = k_ref[...].astype(jnp.bfloat16)
    v = v_ref[...].astype(jnp.bfloat16)
    # batched matmul contracting the shared head_dim (no explicit k.T)
    s = jnp.einsum("hqd,hkd->hqk", q, k, preferred_element_type=jnp.float32)
    s = s + m_ref[...][None, :, :]
    s = s - jnp.max(s, axis=-1, keepdims=True)
    p = jnp.exp(s)
    p = p * pl.reciprocal(jnp.sum(p, axis=-1, keepdims=True), approx=True)
    ctx = jnp.einsum("hqk,hkd->hqd", p.astype(jnp.bfloat16), v,
                     preferred_element_type=jnp.float32)
    o_ref[...] = ctx.astype(o_ref.dtype)


def attention(q4, k4, v4, add_mask):
    """q4,k4,v4: [B, nH, S, dH]; add_mask: [B, 1, S].  All heads per grid step."""
    B, nH, S, dH = q4.shape
    qkv_spec = pl.BlockSpec((None, nH, S, dH), lambda b: (b, 0, 0, 0))
    return pl.pallas_call(
        _attn_kernel,
        out_shape=jax.ShapeDtypeStruct((B, nH, S, dH), jnp.float32),
        grid=(B,),
        in_specs=[qkv_spec, qkv_spec, qkv_spec,
                  pl.BlockSpec((None, 1, S), lambda b: (b, 0, 0))],
        out_specs=pl.BlockSpec((None, nH, S, dH), lambda b: (b, 0, 0, 0)),
        compiler_params=pltpu.CompilerParams(
            dimension_semantics=("parallel",),
            vmem_limit_bytes=_VMEM_LIMIT),
    )(q4, k4, v4, add_mask)


# ----------------------------------------------------------------------------
# Parameter initialization (deterministic, synthetic)
# ----------------------------------------------------------------------------
def init_params(key, cfg):
    keys = iter(jax.random.split(key, 128))

    def dense(din, dout):
        w = 0.02 * jax.random.normal(next(keys), (din, dout), jnp.float32)
        b = jnp.zeros((dout,), jnp.float32)
        return w, b

    H = cfg["hidden_size"]
    p = {}
    word = 0.02 * jax.random.normal(next(keys), (cfg["vocab_size"], H), jnp.float32)
    p["word_emb"] = word.at[cfg["pad_token_id"]].set(0.0)  # padding_idx row = 0
    p["pos_emb"] = 0.02 * jax.random.normal(next(keys), (cfg["max_pos"], H), jnp.float32)
    p["type_emb"] = 0.02 * jax.random.normal(next(keys), (cfg["type_vocab"], H), jnp.float32)
    p["emb_ln_g"] = jnp.ones((H,), jnp.float32)
    p["emb_ln_b"] = jnp.zeros((H,), jnp.float32)

    # modality projections of jointModalBert
    p["visual_proj"] = dense(cfg["visual_dim"] + H, H)
    p["audio_proj"] = dense(cfg["audio_dim"] + H, H)
    p["joint_proj"] = dense(cfg["visual_dim"] + cfg["audio_dim"] + H, H)

    layers = []
    for _ in range(cfg["num_layers"]):
        l = {
            "wq": dense(H, H), "wk": dense(H, H), "wv": dense(H, H), "wo": dense(H, H),
            "ln1_g": jnp.ones((H,), jnp.float32), "ln1_b": jnp.zeros((H,), jnp.float32),
            "wi": dense(H, cfg["intermediate"]), "wf": dense(cfg["intermediate"], H),
            "ln2_g": jnp.ones((H,), jnp.float32), "ln2_b": jnp.zeros((H,), jnp.float32),
        }
        layers.append(l)
    p["layers"] = layers

    p["pooler"] = dense(H, H)
    p["classifier"] = dense(H, cfg["num_labels"])
    return p


# ----------------------------------------------------------------------------
# Forward pass (mirrors jointModalBert.forward, eval mode / dropout off)
# ----------------------------------------------------------------------------
def joint_modal_bert_forward(params, cfg, input_ids, input_visual=None,
                             input_audio=None, token_type_ids=None,
                             attention_mask=None, labels=None):
    B, S = input_ids.shape
    H = cfg["hidden_size"]
    nH = cfg["num_heads"]
    dH = H // nH

    # word embedding lookup (XLA gather)
    word_embeds = params["word_emb"][input_ids]                       # [B, S, H]

    # position + token-type embeddings (added inside the fused embedding kernel)
    if token_type_ids is None:
        token_type_ids = jnp.zeros((B, S), jnp.int32)
    pos = jnp.tile(params["pos_emb"][:S], (B, 1))                     # [B*S, H]
    tok = params["type_emb"][token_type_ids.reshape(-1)]              # [B*S, H]
    extra = pos + tok
    emb_ln = (params["emb_ln_g"], params["emb_ln_b"], _LN_EPS)

    # modality fusion projection (fused with +pos+type and embedding LayerNorm)
    if input_visual is None and input_audio is not None:
        pre = jnp.concatenate([word_embeds, input_audio], axis=-1)
        w, b = params["audio_proj"]
    elif input_audio is None and input_visual is not None:
        pre = jnp.concatenate([word_embeds, input_visual], axis=-1)
        w, b = params["visual_proj"]
    elif input_audio is not None and input_visual is not None:
        pre = jnp.concatenate([word_embeds, input_visual, input_audio], axis=-1)
        w, b = params["joint_proj"]
    else:
        pre = None

    if pre is not None:
        x = fused_linear(pre.reshape(B * S, -1), w, b, residual=extra, ln=emb_ln)
    else:
        x = add_layernorm(word_embeds.reshape(B * S, H), extra,
                          params["emb_ln_g"], params["emb_ln_b"], _LN_EPS)

    # attention mask -> additive mask [B, 1, S]
    if attention_mask is None:
        attention_mask = jnp.ones((B, S), jnp.int32)
    add_mask = (1.0 - attention_mask.astype(jnp.float32))[:, None, :] * -10000.0

    scale = 1.0 / math.sqrt(dH)
    for l in params["layers"]:
        wq, bq = l["wq"]; wk, bk = l["wk"]; wv, bv = l["wv"]
        # fused QKV projection, 1/sqrt(dH) folded into the Q slice
        wqkv = jnp.concatenate([wq * scale, wk, wv], axis=1)          # (H, 3H)
        bqkv = jnp.concatenate([bq * scale, bk, bv], axis=0)          # (3H,)
        qkv = fused_linear(x, wqkv, bqkv)                             # [B*S, 3H]

        q4 = qkv[:, :H].reshape(B, S, nH, dH).transpose(0, 2, 1, 3)
        k4 = qkv[:, H:2 * H].reshape(B, S, nH, dH).transpose(0, 2, 1, 3)
        v4 = qkv[:, 2 * H:].reshape(B, S, nH, dH).transpose(0, 2, 1, 3)
        ctx = attention(q4, k4, v4, add_mask)                         # [B,nH,S,dH]
        ctx = ctx.transpose(0, 2, 1, 3).reshape(B * S, H)
        # TODO(synk): head pack/unpack transposes stay in XLA; in-kernel
        # (nH,S,dH)->(S,H) repacking would need a Mosaic relayout.

        # attention output projection + residual + LayerNorm (fused epilogue)
        x = fused_linear(ctx, *l["wo"], residual=x,
                         ln=(l["ln1_g"], l["ln1_b"], _LN_EPS))
        # feed-forward: up-proj + GELU, then down-proj + residual + LayerNorm
        inter = fused_linear(x, *l["wi"], activation="gelu")
        x = fused_linear(inter, *l["wf"], residual=x,
                         ln=(l["ln2_g"], l["ln2_b"], _LN_EPS))

    # pooler (first token -> dense -> tanh) and classifier: tiny GEMMs, XLA
    first_tok = x.reshape(B, S, H)[:, 0, :]                           # [B, H]
    wp, bp = params["pooler"]
    pooled = jnp.tanh(first_tok @ wp + bp)                            # [B, H]
    wc, bc = params["classifier"]
    logits = pooled @ wc + bc                                         # [B, num_labels]

    if labels is not None:
        logp = jax.nn.log_softmax(logits, axis=-1)
        loss = -jnp.mean(jnp.take_along_axis(logp, labels[:, None], axis=-1))
        return loss, logits
    return (logits,)


# ----------------------------------------------------------------------------
# Example run
# ----------------------------------------------------------------------------
if __name__ == "__main__":
    cfg = dict(
        vocab_size=50, hidden_size=32, num_heads=4, num_layers=2, intermediate=64,
        visual_dim=16, audio_dim=8, max_pos=16, type_vocab=2, num_labels=2,
        pad_token_id=0,
    )
    B, S = 2, 8

    root = jax.random.PRNGKey(0)
    kp, k0, k1, k2 = jax.random.split(root, 4)
    params = init_params(kp, cfg)

    input_ids = jax.random.randint(k0, (B, S), 1, cfg["vocab_size"], dtype=jnp.int32)
    input_visual = jax.random.normal(k1, (B, S, cfg["visual_dim"]), jnp.float32)
    input_audio = jax.random.normal(k2, (B, S, cfg["audio_dim"]), jnp.float32)
    token_type_ids = jnp.zeros((B, S), jnp.int32)
    attention_mask = jnp.ones((B, S), jnp.int32).at[:, -2:].set(0)  # pad last 2 tokens
    labels = jnp.array([0, 1], jnp.int32)

    fwd = jax.jit(lambda p, ids, vis, aud, tt, am, lb: joint_modal_bert_forward(
        p, cfg, ids, vis, aud, tt, am, lb))
    loss, logits = fwd(params, input_ids, input_visual, input_audio,
                       token_type_ids, attention_mask, labels)
    jax.block_until_ready((loss, logits))
    assert logits.shape == (B, cfg["num_labels"])
    print("KERNEL_OK")
</pallas_src>

<mosaic_0001>
module attributes {stable_mosaic.version = 11 : i64} {
  func.func @_fused_linear_kernel(%arg0: i32, %arg1: memref<16x56xf32, #tpu.memory_space<vmem>>, %arg2: memref<56x32xbf16, #tpu.memory_space<vmem>>, %arg3: memref<1x32xf32, #tpu.memory_space<vmem>>, %arg4: memref<16x32xf32, #tpu.memory_space<vmem>>, %arg5: memref<1x32xf32, #tpu.memory_space<vmem>>, %arg6: memref<1x32xf32, #tpu.memory_space<vmem>>, %arg7: memref<16x32xf32, #tpu.memory_space<vmem>>) attributes {dimension_semantics = [#tpu.dimension_semantics<parallel>], iteration_bounds = array<i64: 1>, scalar_prefetch = 0 : i64, scratch_operands = 0 : i64, tpu.core_type = #tpu.core_type<tc>, window_params = [{transform_indices = @transform_0, window_bounds = array<i64: 16, 56>}, {pipeline_mode = #tpu.pipeline_mode<synchronous>, transform_indices = @transform_1, window_bounds = array<i64: 56, 32>}, {pipeline_mode = #tpu.pipeline_mode<synchronous>, transform_indices = @transform_2, window_bounds = array<i64: 1, 32>}, {transform_indices = @transform_3, window_bounds = array<i64: 16, 32>}, {pipeline_mode = #tpu.pipeline_mode<synchronous>, transform_indices = @transform_4, window_bounds = array<i64: 1, 32>}, {pipeline_mode = #tpu.pipeline_mode<synchronous>, transform_indices = @transform_5, window_bounds = array<i64: 1, 32>}, {transform_indices = @transform_6, window_bounds = array<i64: 16, 32>}]} {
    %c0 = arith.constant 0 : index
    %c0_0 = arith.constant 0 : index
    %0 = vector.load %arg1[%c0, %c0_0] : memref<16x56xf32, #tpu.memory_space<vmem>>, vector<16x56xf32>
    %1 = arith.truncf %0 : vector<16x56xf32> to vector<16x56xbf16>
    %c0_1 = arith.constant 0 : index
    %c0_2 = arith.constant 0 : index
    %2 = vector.load %arg2[%c0_1, %c0_2] : memref<56x32xbf16, #tpu.memory_space<vmem>>, vector<56x32xbf16>
    %cst = arith.constant dense<0.000000e+00> : vector<16x32xf32>
    %3 = tpu.matmul %1, %2, %cst {dimension_numbers = #tpu.dot_dimension_numbers<[1], [0], [0], [1], [0, 0, 1, 1], [], []>} : vector<16x56xbf16>, vector<56x32xbf16>, vector<16x32xf32> -> vector<16x32xf32>
    %c0_3 = arith.constant 0 : index
    %c0_4 = arith.constant 0 : index
    %4 = vector.load %arg3[%c0_3, %c0_4] : memref<1x32xf32, #tpu.memory_space<vmem>>, vector<1x32xf32>
    %5 = vector.broadcast %4 : vector<1x32xf32> to vector<16x32xf32>
    %6 = arith.addf %3, %5 : vector<16x32xf32>
    %c0_5 = arith.constant 0 : index
    %c0_6 = arith.constant 0 : index
    %7 = vector.load %arg4[%c0_5, %c0_6] : memref<16x32xf32, #tpu.memory_space<vmem>>, vector<16x32xf32>
    %8 = arith.addf %6, %7 : vector<16x32xf32>
    %cst_7 = arith.constant dense<0.000000e+00> : vector<16xf32>
    %9 = vector.multi_reduction <add>, %8, %cst_7 [1] : vector<16x32xf32> to vector<16xf32>
    %10 = vector.shape_cast %9 : vector<16xf32> to vector<16x1xf32>
    %cst_8 = arith.constant 3.200000e+01 : f32
    %11 = vector.broadcast %cst_8 : f32 to vector<16x1xf32>
    %12 = arith.divf %10, %11 : vector<16x1xf32>
    %13 = vector.broadcast %12 : vector<16x1xf32> to vector<16x32xf32>
    %14 = arith.subf %8, %13 : vector<16x32xf32>
    %15 = vector.broadcast %12 : vector<16x1xf32> to vector<16x32xf32>
    %16 = arith.subf %8, %15 : vector<16x32xf32>
    %17 = arith.mulf %14, %16 : vector<16x32xf32>
    %cst_9 = arith.constant dense<0.000000e+00> : vector<16xf32>
    %18 = vector.multi_reduction <add>, %17, %cst_9 [1] : vector<16x32xf32> to vector<16xf32>
    %19 = vector.shape_cast %18 : vector<16xf32> to vector<16x1xf32>
    %cst_10 = arith.constant 3.200000e+01 : f32
    %20 = vector.broadcast %cst_10 : f32 to vector<16x1xf32>
    %21 = arith.divf %19, %20 : vector<16x1xf32>
    %22 = vector.broadcast %12 : vector<16x1xf32> to vector<16x32xf32>
    %23 = arith.subf %8, %22 : vector<16x32xf32>
    %cst_11 = arith.constant 9.99999996E-13 : f32
    %24 = vector.broadcast %cst_11 : f32 to vector<16x1xf32>
    %25 = arith.addf %21, %24 : vector<16x1xf32>
    %26 = math.rsqrt %25 : vector<16x1xf32>
    %27 = vector.broadcast %26 : vector<16x1xf32> to vector<16x32xf32>
    %28 = arith.mulf %23, %27 : vector<16x32xf32>
    %c0_12 = arith.constant 0 : index
    %c0_13 = arith.constant 0 : index
    %29 = vector.load %arg5[%c0_12, %c0_13] : memref<1x32xf32, #tpu.memory_space<vmem>>, vector<1x32xf32>
    %30 = vector.broadcast %29 : vector<1x32xf32> to vector<16x32xf32>
    %31 = arith.mulf %28, %30 : vector<16x32xf32>
    %c0_14 = arith.constant 0 : index
    %c0_15 = arith.constant 0 : index
    %32 = vector.load %arg6[%c0_14, %c0_15] : memref<1x32xf32, #tpu.memory_space<vmem>>, vector<1x32xf32>
    %33 = vector.broadcast %32 : vector<1x32xf32> to vector<16x32xf32>
    %34 = arith.addf %31, %33 : vector<16x32xf32>
    %c0_16 = arith.constant 0 : index
    %c0_17 = arith.constant 0 : index
    %35 = vector.load %arg7[%c0_16, %c0_17] : memref<16x32xf32, #tpu.memory_space<vmem>>, vector<16x32xf32>
    tpu.vector_store %arg7[%c0_16, %c0_17], %34 {strides = array<i32>} : memref<16x32xf32, #tpu.memory_space<vmem>>, vector<16x32xf32>,
    return
  }
  func.func @transform_0(%arg0: i32) -> (i32, i32) {
    %c0_i32 = arith.constant 0 : i32
    %c0_i32_0 = arith.constant 0 : i32
    return %arg0, %c0_i32 : i32, i32
  }
  func.func @transform_1(%arg0: i32) -> (i32, i32) {
    %c0_i32 = arith.constant 0 : i32
    %c0_i32_0 = arith.constant 0 : i32
    %c0_i32_1 = arith.constant 0 : i32
    return %c0_i32, %c0_i32_0 : i32, i32
  }
  func.func @transform_2(%arg0: i32) -> (i32, i32) {
    %c0_i32 = arith.constant 0 : i32
    %c0_i32_0 = arith.constant 0 : i32
    %c0_i32_1 = arith.constant 0 : i32
    return %c0_i32, %c0_i32_0 : i32, i32
  }
  func.func @transform_3(%arg0: i32) -> (i32, i32) {
    %c0_i32 = arith.constant 0 : i32
    %c0_i32_0 = arith.constant 0 : i32
    return %arg0, %c0_i32 : i32, i32
  }
  func.func @transform_4(%arg0: i32) -> (i32, i32) {
    %c0_i32 = arith.constant 0 : i32
    %c0_i32_0 = arith.constant 0 : i32
    %c0_i32_1 = arith.constant 0 : i32
    return %c0_i32, %c0_i32_0 : i32, i32
  }
  func.func @transform_5(%arg0: i32) -> (i32, i32) {
    %c0_i32 = arith.constant 0 : i32
    %c0_i32_0 = arith.constant 0 : i32
    %c0_i32_1 = arith.constant 0 : i32
    return %c0_i32, %c0_i32_0 : i32, i32
  }
  func.func @transform_6(%arg0: i32) -> (i32, i32) {
    %c0_i32 = arith.constant 0 : i32
    %c0_i32_0 = arith.constant 0 : i32
    return %arg0, %c0_i32 : i32, i32
  }
}

module attributes {stable_mosaic.version = 11 : i64} {
  func.func @_fused_linear_kernel(%arg0: i32, %arg1: memref<16x32xf32, #tpu.memory_space<vmem>>, %arg2: memref<32x96xbf16, #tpu.memory_space<vmem>>, %arg3: memref<1x96xf32, #tpu.memory_space<vmem>>, %arg4: memref<16x96xf32, #tpu.memory_space<vmem>>) attributes {dimension_semantics = [#tpu.dimension_semantics<parallel>], iteration_bounds = array<i64: 1>, scalar_prefetch = 0 : i64, scratch_operands = 0 : i64, tpu.core_type = #tpu.core_type<tc>, window_params = [{transform_indices = @transform_0, window_bounds = array<i64: 16, 32>}, {pipeline_mode = #tpu.pipeline_mode<synchronous>, transform_indices = @transform_1, window_bounds = array<i64: 32, 96>}, {pipeline_mode = #tpu.pipeline_mode<synchronous>, transform_indices = @transform_2, window_bounds = array<i64: 1, 96>}, {transform_indices = @transform_3, window_bounds = array<i64: 16, 96>}]} {
    %c0 = arith.constant 0 : index
    %c0_0 = arith.constant 0 : index
    %0 = vector.load %arg1[%c0, %c0_0] : memref<16x32xf32, #tpu.memory_space<vmem>>, vector<16x32xf32>
    %1 = arith.truncf %0 : vector<16x32xf32> to vector<16x32xbf16>
    %c0_1 = arith.constant 0 : index
    %c0_2 = arith.constant 0 : index
    %2 = vector.load %arg2[%c0_1, %c0_2] : memref<32x96xbf16, #tpu.memory_space<vmem>>, vector<32x96xbf16>
    %cst = arith.constant dense<0.000000e+00> : vector<16x96xf32>
    %3 = tpu.matmul %1, %2, %cst {dimension_numbers = #tpu.dot_dimension_numbers<[1], [0], [0], [1], [0, 0, 1, 1], [], []>} : vector<16x32xbf16>, vector<32x96xbf16>, vector<16x96xf32> -> vector<16x96xf32>
    %c0_3 = arith.constant 0 : index
    %c0_4 = arith.constant 0 : index
    %4 = vector.load %arg3[%c0_3, %c0_4] : memref<1x96xf32, #tpu.memory_space<vmem>>, vector<1x96xf32>
    %5 = vector.broadcast %4 : vector<1x96xf32> to vector<16x96xf32>
    %6 = arith.addf %3, %5 : vector<16x96xf32>
    %c0_5 = arith.constant 0 : index
    %c0_6 = arith.constant 0 : index
    %7 = vector.load %arg4[%c0_5, %c0_6] : memref<16x96xf32, #tpu.memory_space<vmem>>, vector<16x96xf32>
    tpu.vector_store %arg4[%c0_5, %c0_6], %6 {strides = array<i32>} : memref<16x96xf32, #tpu.memory_space<vmem>>, vector<16x96xf32>,
    return
  }
  func.func @transform_0(%arg0: i32) -> (i32, i32) {
    %c0_i32 = arith.constant 0 : i32
    %c0_i32_0 = arith.constant 0 : i32
    return %arg0, %c0_i32 : i32, i32
  }
  func.func @transform_1(%arg0: i32) -> (i32, i32) {
    %c0_i32 = arith.constant 0 : i32
    %c0_i32_0 = arith.constant 0 : i32
    %c0_i32_1 = arith.constant 0 : i32
    return %c0_i32, %c0_i32_0 : i32, i32
  }
  func.func @transform_2(%arg0: i32) -> (i32, i32) {
    %c0_i32 = arith.constant 0 : i32
    %c0_i32_0 = arith.constant 0 : i32
    %c0_i32_1 = arith.constant 0 : i32
    return %c0_i32, %c0_i32_0 : i32, i32
  }
  func.func @transform_3(%arg0: i32) -> (i32, i32) {
    %c0_i32 = arith.constant 0 : i32
    %c0_i32_0 = arith.constant 0 : i32
    return %arg0, %c0_i32 : i32, i32
  }
}

module attributes {stable_mosaic.version = 11 : i64} {
  func.func @_attn_kernel(%arg0: i32, %arg1: memref<1x4x8x8xf32, #tpu.memory_space<vmem>>, %arg2: memref<1x4x8x8xf32, #tpu.memory_space<vmem>>, %arg3: memref<1x4x8x8xf32, #tpu.memory_space<vmem>>, %arg4: memref<1x1x8xf32, #tpu.memory_space<vmem>>, %arg5: memref<1x4x8x8xf32, #tpu.memory_space<vmem>>) attributes {dimension_semantics = [#tpu.dimension_semantics<parallel>], iteration_bounds = array<i64: 2>, scalar_prefetch = 0 : i64, scratch_operands = 0 : i64, tpu.core_type = #tpu.core_type<tc>, window_params = [{transform_indices = @transform_0, window_bounds = array<i64: 1, 4, 8, 8>}, {transform_indices = @transform_1, window_bounds = array<i64: 1, 4, 8, 8>}, {transform_indices = @transform_2, window_bounds = array<i64: 1, 4, 8, 8>}, {transform_indices = @transform_3, window_bounds = array<i64: 1, 1, 8>}, {transform_indices = @transform_4, window_bounds = array<i64: 1, 4, 8, 8>}]} {
    %c0 = arith.constant 0 : index
    %c0_0 = arith.constant 0 : index
    %c0_1 = arith.constant 0 : index
    %c0_2 = arith.constant 0 : index
    %0 = vector.load %arg1[%c0, %c0_0, %c0_1, %c0_2] : memref<1x4x8x8xf32, #tpu.memory_space<vmem>>, vector<1x4x8x8xf32>
    %1 = vector.shape_cast %0 : vector<1x4x8x8xf32> to vector<4x8x8xf32>
    %2 = arith.truncf %1 : vector<4x8x8xf32> to vector<4x8x8xbf16>
    %c0_3 = arith.constant 0 : index
    %c0_4 = arith.constant 0 : index
    %c0_5 = arith.constant 0 : index
    %c0_6 = arith.constant 0 : index
    %3 = vector.load %arg2[%c0_3, %c0_4, %c0_5, %c0_6] : memref<1x4x8x8xf32, #tpu.memory_space<vmem>>, vector<1x4x8x8xf32>
    %4 = vector.shape_cast %3 : vector<1x4x8x8xf32> to vector<4x8x8xf32>
    %5 = arith.truncf %4 : vector<4x8x8xf32> to vector<4x8x8xbf16>
    %c0_7 = arith.constant 0 : index
    %c0_8 = arith.constant 0 : index
    %c0_9 = arith.constant 0 : index
    %c0_10 = arith.constant 0 : index
    %6 = vector.load %arg3[%c0_7, %c0_8, %c0_9, %c0_10] : memref<1x4x8x8xf32, #tpu.memory_space<vmem>>, vector<1x4x8x8xf32>
    %7 = vector.shape_cast %6 : vector<1x4x8x8xf32> to vector<4x8x8xf32>
    %8 = arith.truncf %7 : vector<4x8x8xf32> to vector<4x8x8xbf16>
    "tpu.trace_start"() <{level = 10 : i32, message = "hqd,hkd->hqk"}> : () -> ()
    %cst = arith.constant dense<0.000000e+00> : vector<4x8x8xf32>
    %9 = tpu.matmul %2, %5, %cst {dimension_numbers = #tpu.dot_dimension_numbers<[2], [2], [1], [1], [0, 0, 0, 1, 1, 1], [0], [0]>} : vector<4x8x8xbf16>, vector<4x8x8xbf16>, vector<4x8x8xf32> -> vector<4x8x8xf32>
    "tpu.trace_stop"() : () -> ()
    %c0_11 = arith.constant 0 : index
    %c0_12 = arith.constant 0 : index
    %c0_13 = arith.constant 0 : index
    %10 = vector.load %arg4[%c0_11, %c0_12, %c0_13] : memref<1x1x8xf32, #tpu.memory_space<vmem>>, vector<1x1x8xf32>
    %11 = vector.shape_cast %10 : vector<1x1x8xf32> to vector<1x8xf32>
    %12 = vector.shape_cast %11 : vector<1x8xf32> to vector<1x1x8xf32>
    %13 = vector.broadcast %12 : vector<1x1x8xf32> to vector<4x8x8xf32>
    %14 = arith.addf %9, %13 : vector<4x8x8xf32>
    %cst_14 = arith.constant dense<0xFF800000> : vector<4x8xf32>
    %15 = vector.multi_reduction <maximumf>, %14, %cst_14 [2] : vector<4x8x8xf32> to vector<4x8xf32>
    %16 = vector.shape_cast %15 : vector<4x8xf32> to vector<4x8x1xf32>
    %17 = vector.broadcast %16 : vector<4x8x1xf32> to vector<4x8x8xf32>
    %18 = arith.subf %14, %17 : vector<4x8x8xf32>
    %19 = math.exp %18 : vector<4x8x8xf32>
    %cst_15 = arith.constant dense<0.000000e+00> : vector<4x8xf32>
    %20 = vector.multi_reduction <add>, %19, %cst_15 [2] : vector<4x8x8xf32> to vector<4x8xf32>
    %21 = vector.shape_cast %20 : vector<4x8xf32> to vector<4x8x1xf32>
    %22 = tpu.reciprocal %21 {approx = true} : vector<4x8x1xf32> -> vector<4x8x1xf32>
    %23 = vector.broadcast %22 : vector<4x8x1xf32> to vector<4x8x8xf32>
    %24 = arith.mulf %19, %23 : vector<4x8x8xf32>
    %25 = arith.truncf %24 : vector<4x8x8xf32> to vector<4x8x8xbf16>
    "tpu.trace_start"() <{level = 10 : i32, message = "hqk,hkd->hqd"}> : () -> ()
    %cst_16 = arith.constant dense<0.000000e+00> : vector<4x8x8xf32>
    %26 = tpu.matmul %25, %8, %cst_16 {dimension_numbers = #tpu.dot_dimension_numbers<[2], [1], [1], [2], [0, 0, 0, 1, 1, 2], [0], [0]>} : vector<4x8x8xbf16>, vector<4x8x8xbf16>, vector<4x8x8xf32> -> vector<4x8x8xf32>
    "tpu.trace_stop"() : () -> ()
    %c0_17 = arith.constant 0 : index
    %c0_18 = arith.constant 0 : index
    %c0_19 = arith.constant 0 : index
    %c0_20 = arith.constant 0 : index
    %27 = vector.load %arg5[%c0_17, %c0_18, %c0_19, %c0_20] : memref<1x4x8x8xf32, #tpu.memory_space<vmem>>, vector<1x4x8x8xf32>
    %28 = vector.shape_cast %27 : vector<1x4x8x8xf32> to vector<4x8x8xf32>
    %29 = vector.shape_cast %26 : vector<4x8x8xf32> to vector<1x4x8x8xf32>
    tpu.vector_store %arg5[%c0_17, %c0_18, %c0_19, %c0_20], %29 {strides = array<i32>} : memref<1x4x8x8xf32, #tpu.memory_space<vmem>>, vector<1x4x8x8xf32>,
    return
  }
  func.func @transform_0(%arg0: i32) -> (i32, i32, i32, i32) {
    %c0_i32 = arith.constant 0 : i32
    %c0_i32_0 = arith.constant 0 : i32
    %c0_i32_1 = arith.constant 0 : i32
    %c0_i32_2 = arith.constant 0 : i32
    return %arg0, %c0_i32, %c0_i32_0, %c0_i32_1 : i32, i32, i32, i32
  }
  func.func @transform_1(%arg0: i32) -> (i32, i32, i32, i32) {
    %c0_i32 = arith.constant 0 : i32
    %c0_i32_0 = arith.constant 0 : i32
    %c0_i32_1 = arith.constant 0 : i32
    %c0_i32_2 = arith.constant 0 : i32
    return %arg0, %c0_i32, %c0_i32_0, %c0_i32_1 : i32, i32, i32, i32
  }
  func.func @transform_2(%arg0: i32) -> (i32, i32, i32, i32) {
    %c0_i32 = arith.constant 0 : i32
    %c0_i32_0 = arith.constant 0 : i32
    %c0_i32_1 = arith.constant 0 : i32
    %c0_i32_2 = arith.constant 0 : i32
    return %arg0, %c0_i32, %c0_i32_0, %c0_i32_1 : i32, i32, i32, i32
  }
  func.func @transform_3(%arg0: i32) -> (i32, i32, i32) {
    %c0_i32 = arith.constant 0 : i32
    %c0_i32_0 = arith.constant 0 : i32
    %c0_i32_1 = arith.constant 0 : i32
    return %arg0, %c0_i32, %c0_i32_0 : i32, i32, i32
  }
  func.func @transform_4(%arg0: i32) -> (i32, i32, i32, i32) {
    %c0_i32 = arith.constant 0 : i32
    %c0_i32_0 = arith.constant 0 : i32
    %c0_i32_1 = arith.constant 0 : i32
    %c0_i32_2 = arith.constant 0 : i32
    return %arg0, %c0_i32, %c0_i32_0, %c0_i32_1 : i32, i32, i32, i32
  }
}

module attributes {stable_mosaic.version = 11 : i64} {
  func.func @_fused_linear_kernel(%arg0: i32, %arg1: memref<16x32xf32, #tpu.memory_space<vmem>>, %arg2: memref<32x32xbf16, #tpu.memory_space<vmem>>, %arg3: memref<1x32xf32, #tpu.memory_space<vmem>>, %arg4: memref<16x32xf32, #tpu.memory_space<vmem>>, %arg5: memref<1x32xf32, #tpu.memory_space<vmem>>, %arg6: memref<1x32xf32, #tpu.memory_space<vmem>>, %arg7: memref<16x32xf32, #tpu.memory_space<vmem>>) attributes {dimension_semantics = [#tpu.dimension_semantics<parallel>], iteration_bounds = array<i64: 1>, scalar_prefetch = 0 : i64, scratch_operands = 0 : i64, tpu.core_type = #tpu.core_type<tc>, window_params = [{transform_indices = @transform_0, window_bounds = array<i64: 16, 32>}, {pipeline_mode = #tpu.pipeline_mode<synchronous>, transform_indices = @transform_1, window_bounds = array<i64: 32, 32>}, {pipeline_mode = #tpu.pipeline_mode<synchronous>, transform_indices = @transform_2, window_bounds = array<i64: 1, 32>}, {transform_indices = @transform_3, window_bounds = array<i64: 16, 32>}, {pipeline_mode = #tpu.pipeline_mode<synchronous>, transform_indices = @transform_4, window_bounds = array<i64: 1, 32>}, {pipeline_mode = #tpu.pipeline_mode<synchronous>, transform_indices = @transform_5, window_bounds = array<i64: 1, 32>}, {transform_indices = @transform_6, window_bounds = array<i64: 16, 32>}]} {
    %c0 = arith.constant 0 : index
    %c0_0 = arith.constant 0 : index
    %0 = vector.load %arg1[%c0, %c0_0] : memref<16x32xf32, #tpu.memory_space<vmem>>, vector<16x32xf32>
    %1 = arith.truncf %0 : vector<16x32xf32> to vector<16x32xbf16>
    %c0_1 = arith.constant 0 : index
    %c0_2 = arith.constant 0 : index
    %2 = vector.load %arg2[%c0_1, %c0_2] : memref<32x32xbf16, #tpu.memory_space<vmem>>, vector<32x32xbf16>
    %cst = arith.constant dense<0.000000e+00> : vector<16x32xf32>
    %3 = tpu.matmul %1, %2, %cst {dimension_numbers = #tpu.dot_dimension_numbers<[1], [0], [0], [1], [0, 0, 1, 1], [], []>} : vector<16x32xbf16>, vector<32x32xbf16>, vector<16x32xf32> -> vector<16x32xf32>
    %c0_3 = arith.constant 0 : index
    %c0_4 = arith.constant 0 : index
    %4 = vector.load %arg3[%c0_3, %c0_4] : memref<1x32xf32, #tpu.memory_space<vmem>>, vector<1x32xf32>
    %5 = vector.broadcast %4 : vector<1x32xf32> to vector<16x32xf32>
    %6 = arith.addf %3, %5 : vector<16x32xf32>
    %c0_5 = arith.constant 0 : index
    %c0_6 = arith.constant 0 : index
    %7 = vector.load %arg4[%c0_5, %c0_6] : memref<16x32xf32, #tpu.memory_space<vmem>>, vector<16x32xf32>
    %8 = arith.addf %6, %7 : vector<16x32xf32>
    %cst_7 = arith.constant dense<0.000000e+00> : vector<16xf32>
    %9 = vector.multi_reduction <add>, %8, %cst_7 [1] : vector<16x32xf32> to vector<16xf32>
    %10 = vector.shape_cast %9 : vector<16xf32> to vector<16x1xf32>
    %cst_8 = arith.constant 3.200000e+01 : f32
    %11 = vector.broadcast %cst_8 : f32 to vector<16x1xf32>
    %12 = arith.divf %10, %11 : vector<16x1xf32>
    %13 = vector.broadcast %12 : vector<16x1xf32> to vector<16x32xf32>
    %14 = arith.subf %8, %13 : vector<16x32xf32>
    %15 = vector.broadcast %12 : vector<16x1xf32> to vector<16x32xf32>
    %16 = arith.subf %8, %15 : vector<16x32xf32>
    %17 = arith.mulf %14, %16 : vector<16x32xf32>
    %cst_9 = arith.constant dense<0.000000e+00> : vector<16xf32>
    %18 = vector.multi_reduction <add>, %17, %cst_9 [1] : vector<16x32xf32> to vector<16xf32>
    %19 = vector.shape_cast %18 : vector<16xf32> to vector<16x1xf32>
    %cst_10 = arith.constant 3.200000e+01 : f32
    %20 = vector.broadcast %cst_10 : f32 to vector<16x1xf32>
    %21 = arith.divf %19, %20 : vector<16x1xf32>
    %22 = vector.broadcast %12 : vector<16x1xf32> to vector<16x32xf32>
    %23 = arith.subf %8, %22 : vector<16x32xf32>
    %cst_11 = arith.constant 9.99999996E-13 : f32
    %24 = vector.broadcast %cst_11 : f32 to vector<16x1xf32>
    %25 = arith.addf %21, %24 : vector<16x1xf32>
    %26 = math.rsqrt %25 : vector<16x1xf32>
    %27 = vector.broadcast %26 : vector<16x1xf32> to vector<16x32xf32>
    %28 = arith.mulf %23, %27 : vector<16x32xf32>
    %c0_12 = arith.constant 0 : index
    %c0_13 = arith.constant 0 : index
    %29 = vector.load %arg5[%c0_12, %c0_13] : memref<1x32xf32, #tpu.memory_space<vmem>>, vector<1x32xf32>
    %30 = vector.broadcast %29 : vector<1x32xf32> to vector<16x32xf32>
    %31 = arith.mulf %28, %30 : vector<16x32xf32>
    %c0_14 = arith.constant 0 : index
    %c0_15 = arith.constant 0 : index
    %32 = vector.load %arg6[%c0_14, %c0_15] : memref<1x32xf32, #tpu.memory_space<vmem>>, vector<1x32xf32>
    %33 = vector.broadcast %32 : vector<1x32xf32> to vector<16x32xf32>
    %34 = arith.addf %31, %33 : vector<16x32xf32>
    %c0_16 = arith.constant 0 : index
    %c0_17 = arith.constant 0 : index
    %35 = vector.load %arg7[%c0_16, %c0_17] : memref<16x32xf32, #tpu.memory_space<vmem>>, vector<16x32xf32>
    tpu.vector_store %arg7[%c0_16, %c0_17], %34 {strides = array<i32>} : memref<16x32xf32, #tpu.memory_space<vmem>>, vector<16x32xf32>,
    return
  }
  func.func @transform_0(%arg0: i32) -> (i32, i32) {
    %c0_i32 = arith.constant 0 : i32
    %c0_i32_0 = arith.constant 0 : i32
    return %arg0, %c0_i32 : i32, i32
  }
  func.func @transform_1(%arg0: i32) -> (i32, i32) {
    %c0_i32 = arith.constant 0 : i32
    %c0_i32_0 = arith.constant 0 : i32
    %c0_i32_1 = arith.constant 0 : i32
    return %c0_i32, %c0_i32_0 : i32, i32
  }
  func.func @transform_2(%arg0: i32) -> (i32, i32) {
    %c0_i32 = arith.constant 0 : i32
    %c0_i32_0 = arith.constant 0 : i32
    %c0_i32_1 = arith.constant 0 : i32
    return %c0_i32, %c0_i32_0 : i32, i32
  }
  func.func @transform_3(%arg0: i32) -> (i32, i32) {
    %c0_i32 = arith.constant 0 : i32
    %c0_i32_0 = arith.constant 0 : i32
    return %arg0, %c0_i32 : i32, i32
  }
  func.func @transform_4(%arg0: i32) -> (i32, i32) {
    %c0_i32 = arith.constant 0 : i32
    %c0_i32_0 = arith.constant 0 : i32
    %c0_i32_1 = arith.constant 0 : i32
    return %c0_i32, %c0_i32_0 : i32, i32
  }
  func.func @transform_5(%arg0: i32) -> (i32, i32) {
    %c0_i32 = arith.constant 0 : i32
    %c0_i32_0 = arith.constant 0 : i32
    %c0_i32_1 = arith.constant 0 : i32
    return %c0_i32, %c0_i32_0 : i32, i32
  }
  func.func @transform_6(%arg0: i32) -> (i32, i32) {
    %c0_i32 = arith.constant 0 : i32
    %c0_i32_0 = arith.constant 0 : i32
    return %arg0, %c0_i32 : i32, i32
  }
}

module attributes {stable_mosaic.version = 11 : i64} {
  func.func @_fused_linear_kernel(%arg0: i32, %arg1: memref<16x32xf32, #tpu.memory_space<vmem>>, %arg2: memref<32x64xbf16, #tpu.memory_space<vmem>>, %arg3: memref<1x64xf32, #tpu.memory_space<vmem>>, %arg4: memref<16x64xf32, #tpu.memory_space<vmem>>) attributes {dimension_semantics = [#tpu.dimension_semantics<parallel>], iteration_bounds = array<i64: 1>, scalar_prefetch = 0 : i64, scratch_operands = 0 : i64, tpu.core_type = #tpu.core_type<tc>, window_params = [{transform_indices = @transform_0, window_bounds = array<i64: 16, 32>}, {pipeline_mode = #tpu.pipeline_mode<synchronous>, transform_indices = @transform_1, window_bounds = array<i64: 32, 64>}, {pipeline_mode = #tpu.pipeline_mode<synchronous>, transform_indices = @transform_2, window_bounds = array<i64: 1, 64>}, {transform_indices = @transform_3, window_bounds = array<i64: 16, 64>}]} {
    %c0 = arith.constant 0 : index
    %c0_0 = arith.constant 0 : index
    %0 = vector.load %arg1[%c0, %c0_0] : memref<16x32xf32, #tpu.memory_space<vmem>>, vector<16x32xf32>
    %1 = arith.truncf %0 : vector<16x32xf32> to vector<16x32xbf16>
    %c0_1 = arith.constant 0 : index
    %c0_2 = arith.constant 0 : index
    %2 = vector.load %arg2[%c0_1, %c0_2] : memref<32x64xbf16, #tpu.memory_space<vmem>>, vector<32x64xbf16>
    %cst = arith.constant dense<0.000000e+00> : vector<16x64xf32>
    %3 = tpu.matmul %1, %2, %cst {dimension_numbers = #tpu.dot_dimension_numbers<[1], [0], [0], [1], [0, 0, 1, 1], [], []>} : vector<16x32xbf16>, vector<32x64xbf16>, vector<16x64xf32> -> vector<16x64xf32>
    %c0_3 = arith.constant 0 : index
    %c0_4 = arith.constant 0 : index
    %4 = vector.load %arg3[%c0_3, %c0_4] : memref<1x64xf32, #tpu.memory_space<vmem>>, vector<1x64xf32>
    %5 = vector.broadcast %4 : vector<1x64xf32> to vector<16x64xf32>
    %6 = arith.addf %3, %5 : vector<16x64xf32>
    %cst_5 = arith.constant 5.000000e-01 : f32
    %7 = vector.broadcast %cst_5 : f32 to vector<16x64xf32>
    %8 = arith.mulf %7, %6 : vector<16x64xf32>
    %cst_6 = arith.constant 4.471500e-02 : f32
    %9 = vector.broadcast %cst_6 : f32 to vector<16x64xf32>
    %10 = arith.mulf %9, %6 : vector<16x64xf32>
    %11 = arith.mulf %10, %6 : vector<16x64xf32>
    %12 = arith.mulf %11, %6 : vector<16x64xf32>
    %13 = arith.addf %6, %12 : vector<16x64xf32>
    %cst_7 = arith.constant 0.797884583 : f32
    %14 = vector.broadcast %cst_7 : f32 to vector<16x64xf32>
    %15 = arith.mulf %14, %13 : vector<16x64xf32>
    %16 = math.tanh %15 : vector<16x64xf32>
    %cst_8 = arith.constant 1.000000e+00 : f32
    %17 = vector.broadcast %cst_8 : f32 to vector<16x64xf32>
    %18 = arith.addf %17, %16 : vector<16x64xf32>
    %19 = arith.mulf %8, %18 : vector<16x64xf32>
    %c0_9 = arith.constant 0 : index
    %c0_10 = arith.constant 0 : index
    %20 = vector.load %arg4[%c0_9, %c0_10] : memref<16x64xf32, #tpu.memory_space<vmem>>, vector<16x64xf32>
    tpu.vector_store %arg4[%c0_9, %c0_10], %19 {strides = array<i32>} : memref<16x64xf32, #tpu.memory_space<vmem>>, vector<16x64xf32>,
    return
  }
  func.func @transform_0(%arg0: i32) -> (i32, i32) {
    %c0_i32 = arith.constant 0 : i32
    %c0_i32_0 = arith.constant 0 : i32
    return %arg0, %c0_i32 : i32, i32
  }
  func.func @transform_1(%arg0: i32) -> (i32, i32) {
    %c0_i32 = arith.constant 0 : i32
    %c0_i32_0 = arith.constant 0 : i32
    %c0_i32_1 = arith.constant 0 : i32
    return %c0_i32, %c0_i32_0 : i32, i32
  }
  func.func @transform_2(%arg0: i32) -> (i32, i32) {
    %c0_i32 = arith.constant 0 : i32
    %c0_i32_0 = arith.constant 0 : i32
    %c0_i32_1 = arith.constant 0 : i32
    return %c0_i32, %c0_i32_0 : i32, i32
  }
  func.func @transform_3(%arg0: i32) -> (i32, i32) {
    %c0_i32 = arith.constant 0 : i32
    %c0_i32_0 = arith.constant 0 : i32
    return %arg0, %c0_i32 : i32, i32
  }
}

module attributes {stable_mosaic.version = 11 : i64} {
  func.func @_fused_linear_kernel(%arg0: i32, %arg1: memref<16x64xf32, #tpu.memory_space<vmem>>, %arg2: memref<64x32xbf16, #tpu.memory_space<vmem>>, %arg3: memref<1x32xf32, #tpu.memory_space<vmem>>, %arg4: memref<16x32xf32, #tpu.memory_space<vmem>>, %arg5: memref<1x32xf32, #tpu.memory_space<vmem>>, %arg6: memref<1x32xf32, #tpu.memory_space<vmem>>, %arg7: memref<16x32xf32, #tpu.memory_space<vmem>>) attributes {dimension_semantics = [#tpu.dimension_semantics<parallel>], iteration_bounds = array<i64: 1>, scalar_prefetch = 0 : i64, scratch_operands = 0 : i64, tpu.core_type = #tpu.core_type<tc>, window_params = [{transform_indices = @transform_0, window_bounds = array<i64: 16, 64>}, {pipeline_mode = #tpu.pipeline_mode<synchronous>, transform_indices = @transform_1, window_bounds = array<i64: 64, 32>}, {pipeline_mode = #tpu.pipeline_mode<synchronous>, transform_indices = @transform_2, window_bounds = array<i64: 1, 32>}, {transform_indices = @transform_3, window_bounds = array<i64: 16, 32>}, {pipeline_mode = #tpu.pipeline_mode<synchronous>, transform_indices = @transform_4, window_bounds = array<i64: 1, 32>}, {pipeline_mode = #tpu.pipeline_mode<synchronous>, transform_indices = @transform_5, window_bounds = array<i64: 1, 32>}, {transform_indices = @transform_6, window_bounds = array<i64: 16, 32>}]} {
    %c0 = arith.constant 0 : index
    %c0_0 = arith.constant 0 : index
    %0 = vector.load %arg1[%c0, %c0_0] : memref<16x64xf32, #tpu.memory_space<vmem>>, vector<16x64xf32>
    %1 = arith.truncf %0 : vector<16x64xf32> to vector<16x64xbf16>
    %c0_1 = arith.constant 0 : index
    %c0_2 = arith.constant 0 : index
    %2 = vector.load %arg2[%c0_1, %c0_2] : memref<64x32xbf16, #tpu.memory_space<vmem>>, vector<64x32xbf16>
    %cst = arith.constant dense<0.000000e+00> : vector<16x32xf32>
    %3 = tpu.matmul %1, %2, %cst {dimension_numbers = #tpu.dot_dimension_numbers<[1], [0], [0], [1], [0, 0, 1, 1], [], []>} : vector<16x64xbf16>, vector<64x32xbf16>, vector<16x32xf32> -> vector<16x32xf32>
    %c0_3 = arith.constant 0 : index
    %c0_4 = arith.constant 0 : index
    %4 = vector.load %arg3[%c0_3, %c0_4] : memref<1x32xf32, #tpu.memory_space<vmem>>, vector<1x32xf32>
    %5 = vector.broadcast %4 : vector<1x32xf32> to vector<16x32xf32>
    %6 = arith.addf %3, %5 : vector<16x32xf32>
    %c0_5 = arith.constant 0 : index
    %c0_6 = arith.constant 0 : index
    %7 = vector.load %arg4[%c0_5, %c0_6] : memref<16x32xf32, #tpu.memory_space<vmem>>, vector<16x32xf32>
    %8 = arith.addf %6, %7 : vector<16x32xf32>
    %cst_7 = arith.constant dense<0.000000e+00> : vector<16xf32>
    %9 = vector.multi_reduction <add>, %8, %cst_7 [1] : vector<16x32xf32> to vector<16xf32>
    %10 = vector.shape_cast %9 : vector<16xf32> to vector<16x1xf32>
    %cst_8 = arith.constant 3.200000e+01 : f32
    %11 = vector.broadcast %cst_8 : f32 to vector<16x1xf32>
    %12 = arith.divf %10, %11 : vector<16x1xf32>
    %13 = vector.broadcast %12 : vector<16x1xf32> to vector<16x32xf32>
    %14 = arith.subf %8, %13 : vector<16x32xf32>
    %15 = vector.broadcast %12 : vector<16x1xf32> to vector<16x32xf32>
    %16 = arith.subf %8, %15 : vector<16x32xf32>
    %17 = arith.mulf %14, %16 : vector<16x32xf32>
    %cst_9 = arith.constant dense<0.000000e+00> : vector<16xf32>
    %18 = vector.multi_reduction <add>, %17, %cst_9 [1] : vector<16x32xf32> to vector<16xf32>
    %19 = vector.shape_cast %18 : vector<16xf32> to vector<16x1xf32>
    %cst_10 = arith.constant 3.200000e+01 : f32
    %20 = vector.broadcast %cst_10 : f32 to vector<16x1xf32>
    %21 = arith.divf %19, %20 : vector<16x1xf32>
    %22 = vector.broadcast %12 : vector<16x1xf32> to vector<16x32xf32>
    %23 = arith.subf %8, %22 : vector<16x32xf32>
    %cst_11 = arith.constant 9.99999996E-13 : f32
    %24 = vector.broadcast %cst_11 : f32 to vector<16x1xf32>
    %25 = arith.addf %21, %24 : vector<16x1xf32>
    %26 = math.rsqrt %25 : vector<16x1xf32>
    %27 = vector.broadcast %26 : vector<16x1xf32> to vector<16x32xf32>
    %28 = arith.mulf %23, %27 : vector<16x32xf32>
    %c0_12 = arith.constant 0 : index
    %c0_13 = arith.constant 0 : index
    %29 = vector.load %arg5[%c0_12, %c0_13] : memref<1x32xf32, #tpu.memory_space<vmem>>, vector<1x32xf32>
    %30 = vector.broadcast %29 : vector<1x32xf32> to vector<16x32xf32>
    %31 = arith.mulf %28, %30 : vector<16x32xf32>
    %c0_14 = arith.constant 0 : index
    %c0_15 = arith.constant 0 : index
    %32 = vector.load %arg6[%c0_14, %c0_15] : memref<1x32xf32, #tpu.memory_space<vmem>>, vector<1x32xf32>
    %33 = vector.broadcast %32 : vector<1x32xf32> to vector<16x32xf32>
    %34 = arith.addf %31, %33 : vector<16x32xf32>
    %c0_16 = arith.constant 0 : index
    %c0_17 = arith.constant 0 : index
    %35 = vector.load %arg7[%c0_16, %c0_17] : memref<16x32xf32, #tpu.memory_space<vmem>>, vector<16x32xf32>
    tpu.vector_store %arg7[%c0_16, %c0_17], %34 {strides = array<i32>} : memref<16x32xf32, #tpu.memory_space<vmem>>, vector<16x32xf32>,
    return
  }
  func.func @transform_0(%arg0: i32) -> (i32, i32) {
    %c0_i32 = arith.constant 0 : i32
    %c0_i32_0 = arith.constant 0 : i32
    return %arg0, %c0_i32 : i32, i32
  }
  func.func @transform_1(%arg0: i32) -> (i32, i32) {
    %c0_i32 = arith.constant 0 : i32
    %c0_i32_0 = arith.constant 0 : i32
    %c0_i32_1 = arith.constant 0 : i32
    return %c0_i32, %c0_i32_0 : i32, i32
  }
  func.func @transform_2(%arg0: i32) -> (i32, i32) {
    %c0_i32 = arith.constant 0 : i32
    %c0_i32_0 = arith.constant 0 : i32
    %c0_i32_1 = arith.constant 0 : i32
    return %c0_i32, %c0_i32_0 : i32, i32
  }
  func.func @transform_3(%arg0: i32) -> (i32, i32) {
    %c0_i32 = arith.constant 0 : i32
    %c0_i32_0 = arith.constant 0 : i32
    return %arg0, %c0_i32 : i32, i32
  }
  func.func @transform_4(%arg0: i32) -> (i32, i32) {
    %c0_i32 = arith.constant 0 : i32
    %c0_i32_0 = arith.constant 0 : i32
    %c0_i32_1 = arith.constant 0 : i32
    return %c0_i32, %c0_i32_0 : i32, i32
  }
  func.func @transform_5(%arg0: i32) -> (i32, i32) {
    %c0_i32 = arith.constant 0 : i32
    %c0_i32_0 = arith.constant 0 : i32
    %c0_i32_1 = arith.constant 0 : i32
    return %c0_i32, %c0_i32_0 : i32, i32
  }
  func.func @transform_6(%arg0: i32) -> (i32, i32) {
    %c0_i32 = arith.constant 0 : i32
    %c0_i32_0 = arith.constant 0 : i32
    return %arg0, %c0_i32 : i32, i32
  }
}

</mosaic_0001>

<llo_original>
// kernel: _lambda_.11
$region0: #{_lambda_.11}
  #allocation0 [shape = 'u32[]', space=smem, size = 0x4, offset = 0x4, fixed_abs, tag = 'smem constant byte address 0x4 - core index']
  #allocation1 [shape = 'u32[144,128]{1,0:T(1,128)}', space=vmem, size = 0x12000, scoped, tag = 'internal scratch']
  %s0 = inlined_call_operand.vmem [shape: f32[16,56], index: 0, kind: input, shape index: {}]
  %s1 = inlined_call_operand.vmem [shape: bf16[56,32], index: 1, kind: input, shape index: {}]
  %s2 = inlined_call_operand.vmem [shape: f32[1,32], index: 2, kind: input, shape index: {}]
  %s3 = inlined_call_operand.vmem [shape: f32[16,32], index: 3, kind: input, shape index: {}]
  %s4 = inlined_call_operand.vmem [shape: f32[1,32], index: 4, kind: input, shape index: {}]
  %s5 = inlined_call_operand.vmem [shape: f32[1,32], index: 5, kind: input, shape index: {}]
  %s6 = inlined_call_operand.vmem [shape: f32[16,32], index: 6, kind: output, shape index: {}]
  %s7 = sld [smem:[#allocation0]]
  $region34: #{_lambda_.11} parent=0
    _
  %s9 = ssub.s32 1, %s7
  %s10 = scalar_select 0, %s9, %s7
  // Predicated region
  $region2: #{_lambda_.11} parent=0 // pred_check
    _
  $region3: #{_lambda_.11} parent=0 // pred_check_branch
    %12 = sbr.rel (0) target = $region5
  $region4: #{_lambda_.11} parent=0 // pred_region
    _
  $region5: #{_lambda_.11} parent=0 // pred_fallthru
    _
  // Predicated region
  $region6: #{_lambda_.11} parent=0 // pred_check
    _
  $region7: #{_lambda_.11} parent=0 // pred_check_branch
    %14 = sbr.rel (0) target = $region9
  $region8: #{_lambda_.11} parent=0 // pred_region
    _
  $region9: #{_lambda_.11} parent=0 // pred_fallthru
    _
  // Predicated region
  $region10: #{_lambda_.11} parent=0 // pred_check
    _
  $region11: #{_lambda_.11} parent=0 // pred_check_branch
    %16 = sbr.rel (0) target = $region13
  $region12: #{_lambda_.11} parent=0 // pred_region
    _
  $region13: #{_lambda_.11} parent=0 // pred_fallthru
    _
  // Predicated region
  $region14: #{_lambda_.11} parent=0 // pred_check
    _
  $region15: #{_lambda_.11} parent=0 // pred_check_branch
    %18 = sbr.rel (0) target = $region17
  $region16: #{_lambda_.11} parent=0 // pred_region
    _
  $region17: #{_lambda_.11} parent=0 // pred_fallthru
    _
  // Predicated region
  $region18: #{_lambda_.11} parent=0 // pred_check
    _
  $region19: #{_lambda_.11} parent=0 // pred_check_branch
    %20 = sbr.rel (0) target = $region21
  $region20: #{_lambda_.11} parent=0 // pred_region
    _
  $region21: #{_lambda_.11} parent=0 // pred_fallthru
    _
  // Predicated region
  $region22: #{_lambda_.11} parent=0 // pred_check
    _
  $region23: #{_lambda_.11} parent=0 // pred_check_branch
    %22 = sbr.rel (0) target = $region25
  $region24: #{_lambda_.11} parent=0 // pred_region
    _
  $region25: #{_lambda_.11} parent=0 // pred_fallthru
    _
  %v24 = vld [vmem:[%s0] sm:$0xff]
  %v25 = vld [vmem:[%s0 + $0x8] sm:$0xff]
  %v26 = vpack.c.bf16 %v25, %v24
  %v27 = vld [vmem:[%s1] sm:$0xf]
  %v28 = vld [vmem:[%s1 + $0x4] sm:$0xf]
  %v29 = vld [vmem:[%s1 + $0x8] sm:$0xf]
  %v30 = vld [vmem:[%s1 + $0xc] sm:$0xf]
  %v31 = vld [vmem:[%s1 + $0x10] sm:$0xf]
  %v32 = vld [vmem:[%s1 + $0x14] sm:$0xf]
  %v33 = vld [vmem:[%s1 + $0x18] sm:$0xf]
  %v34 = vld [vmem:[%s2] sm:$0x1]
  %v36 = vlaneseq
  %v37 = vshrl.u32 %v36, 7
  %v38 = vsub.s32 0, %v37
  %v39 = vrot.slane %v34, %v38
  %v48 = vunpack.c.l.b16 %v27
  %v49 = vunpack.c.l.b16 %v28
  %v50 = vunpack.c.l.b16 %v29
  %v51 = vunpack.c.l.b16 %v30
  %v52 = vunpack.c.l.b16 %v31
  %v53 = vunpack.c.l.b16 %v32
  %v54 = vunpack.c.l.b16 %v33
  %v55 = vpack.c.b16 %v49, %v48
  %v56 = vpack.c.b16 %v51, %v50
  %v57 = vpack.c.b16 %v53, %v52
  %v58 = vpack.c.b16 %v54, %v54
  %vm62 = vcmask 457728
  %v64 = vsel %vm62, %v26, 0
  %vm66 = vcmask 1043456
  %v68 = vsel %vm66, %v58, 0
  %70 = vmatprep.subr.bf16.mxu0 0
  %71 = vmatpush1.bf16.msra.mxu0 0
  %72 = vmatprep.subr.bf16.mxu0 0
  %73 = vmatpush1.bf16.msra.mxu0 0
  %74 = vmatprep.subr.bf16.mxu0 0
  %75 = vmatpush1.bf16.msra.mxu0 0
  %76 = vmatprep.subr.bf16.mxu0 0
  %77 = vmatpush1.bf16.msra.mxu0 0
  %78 = vmatprep.subr.bf16.mxu0 0
  %79 = vmatpush1.bf16.msra.mxu0 %v68
  %80 = vmatprep.subr.bf16.mxu0 0
  %81 = vmatpush1.bf16.msra.mxu0 %v57
  %82 = vmatprep.subr.bf16.mxu0 0
  %83 = vmatpush1.bf16.msra.mxu0 %v56
  %84 = vmatprep.subr.bf16.mxu0 0
  %85 = vmatpush1.bf16.msra.mxu0 %v55
  %86 = vmatprep.subr.bf16.mxu0 0
  %87 = vmatpush2.bf16.msra.mxu0 0
  %88 = vmatprep.subr.bf16.mxu0 0
  %89 = vmatpush2.bf16.msra.mxu0 0
  %90 = vmatprep.subr.bf16.mxu0 0
  %91 = vmatpush2.bf16.msra.mxu0 0
  %92 = vmatprep.subr.bf16.mxu0 0
  %93 = vmatpush2.bf16.msra.mxu0 0
  %94 = vmatprep.subr.bf16.mxu0 0
  %95 = vmatpush2.bf16.msra.mxu0 0
  %96 = vmatprep.subr.bf16.mxu0 0
  %97 = vmatpush2.bf16.msra.mxu0 0
  %98 = vmatprep.subr.bf16.mxu0 0
  %99 = vmatpush2.bf16.msra.mxu0 0
  %100 = vmatprep.subr.bf16.mxu0 0
  %101 = vmatpush2.bf16.msra.mxu0 0
  %102 = vmatprep.mubr.bf16.mxu0 0
  %103 = vmatmul.mubr.bf16.gmra.mxu0 %v64
  %v104 = vpop.f32.mrf.mxu0
  %v105 = vadd.f32 %v39, %v104
  %v106 = vpop.f32.mrf.mxu0
  %v107 = vpop.f32.mrf.mxu0
  %v108 = vadd.f32 %v39, %v107
  %v109 = vpop.f32.mrf.mxu0
  %110 = vdwg.mxu0
  %v111 = vld [vmem:[%s3] sm:$0xff]
  %v112 = vld [vmem:[%s3 + $0x8] sm:$0xff]
  %v113 = vadd.f32 %v105, %v111
  %v114 = vadd.f32 %v108, %v112
  %vm115 = vcmask 261120
  %v116 = vsel %vm115, %v113, 0.0
  %117 = vadd.xlane.f32.xlu0 %v116
  %v118 = vpop.xlane.xlu0 %117
  %v119 = vsel %vm115, %v114, 0.0
  %120 = vadd.xlane.f32.xlu0 %v119
  %v121 = vpop.xlane.xlu0 %120
  %v122 = vrcp.pop 32.0
  %v123 = vmul.f32 %v118, %v122
  %v124 = vmul.f32 %v121, %v122
  %v125 = vsub.f32 %v113, %v123
  %v126 = vsub.f32 %v114, %v124
  %v127 = vmul.f32 %v125, %v125
  %v128 = vmul.f32 %v126, %v126
  %v129 = vsel %vm115, %v127, 0.0
  %130 = vadd.xlane.f32.xlu0 %v129
  %v131 = vpop.xlane.xlu0 %130
  %v132 = vsel %vm115, %v128, 0.0
  %133 = vadd.xlane.f32.xlu0 %v132
  %v134 = vpop.xlane.xlu0 %133
  %v135 = vmul.f32 %v131, %v122
  %v136 = vmul.f32 %v134, %v122
  %v137 = vadd.f32 %v135, 1e-12
  %v138 = vadd.f32 %v136, 1e-12
  %v139 = vrsqrt.pop %v137
  %v140 = vrsqrt.pop %v138
  %v141 = vmul.f32 %v125, %v139
  %v142 = vmul.f32 %v126, %v140
  %v143 = vld [vmem:[%s4] sm:$0x1]
  %v145 = vlaneseq
  %v146 = vshrl.u32 %v145, 7
  %v147 = vsub.s32 0, %v146
  %v148 = vrot.slane %v143, %v147
  %v150 = vmul.f32 %v141, %v148
  %v151 = vmul.f32 %v142, %v148
  %v152 = vld [vmem:[%s5] sm:$0x1]
  %v154 = vlaneseq
  %v155 = vshrl.u32 %v154, 7
  %v156 = vsub.s32 0, %v155
  %v157 = vrot.slane %v152, %v156
  %v159 = vadd.f32 %v150, %v157
  %v160 = vadd.f32 %v151, %v157
  %161 = vst.msk [vmem:[%s6] sm:$0xff] %vm115, %v159
  %162 = vst.msk [vmem:[%s6 + $0x8] sm:$0xff] %vm115, %v160
  // Predicated region
  $region26: #{_lambda_.11} parent=0 // pred_check
    _
  $region27: #{_lambda_.11} parent=0 // pred_check_branch
    %164 = sbr.rel (0) target = $region29
  $region28: #{_lambda_.11} parent=0 // pred_region
    _
  $region29: #{_lambda_.11} parent=0 // pred_fallthru
    _
  // Predicated region
  $region30: #{_lambda_.11} parent=0 // pred_check
    _
  $region31: #{_lambda_.11} parent=0 // pred_check_branch
    %166 = sbr.rel (0) target = $region33
  $region32: #{_lambda_.11} parent=0 // pred_region
    _
  $region33: #{_lambda_.11} parent=0 // pred_fallthru
    _

// kernel: _lambda_.12
$region0: #{_lambda_.12}
  #allocation0 [shape = 'u32[]', space=smem, size = 0x4, offset = 0x4, fixed_abs, tag = 'smem constant byte address 0x4 - core index']
  #allocation1 [shape = 'u32[144,128]{1,0:T(1,128)}', space=vmem, size = 0x12000, scoped, tag = 'internal scratch']
  %s0 = inlined_call_operand.vmem [shape: f32[16,32], index: 0, kind: input, shape index: {}]
  %s1 = inlined_call_operand.vmem [shape: bf16[32,96], index: 1, kind: input, shape index: {}]
  %s2 = inlined_call_operand.vmem [shape: f32[1,96], index: 2, kind: input, shape index: {}]
  %s3 = inlined_call_operand.vmem [shape: f32[16,96], index: 3, kind: output, shape index: {}]
  %s4 = sld [smem:[#allocation0]]
  $region22: #{_lambda_.12} parent=0
    _
  %s6 = ssub.s32 1, %s4
  %s7 = scalar_select 0, %s6, %s4
  // Predicated region
  $region2: #{_lambda_.12} parent=0 // pred_check
    _
  $region3: #{_lambda_.12} parent=0 // pred_check_branch
    %9 = sbr.rel (0) target = $region5
  $region4: #{_lambda_.12} parent=0 // pred_region
    _
  $region5: #{_lambda_.12} parent=0 // pred_fallthru
    _
  // Predicated region
  $region6: #{_lambda_.12} parent=0 // pred_check
    _
  $region7: #{_lambda_.12} parent=0 // pred_check_branch
    %11 = sbr.rel (0) target = $region9
  $region8: #{_lambda_.12} parent=0 // pred_region
    _
  $region9: #{_lambda_.12} parent=0 // pred_fallthru
    _
  // Predicated region
  $region10: #{_lambda_.12} parent=0 // pred_check
    _
  $region11: #{_lambda_.12} parent=0 // pred_check_branch
    %13 = sbr.rel (0) target = $region13
  $region12: #{_lambda_.12} parent=0 // pred_region
    _
  $region13: #{_lambda_.12} parent=0 // pred_fallthru
    _
  %v15 = vld [vmem:[%s0] sm:$0xff]
  %v16 = vld [vmem:[%s0 + $0x8] sm:$0xff]
  %v17 = vpack.c.bf16 %v16, %v15
  %v18 = vld [vmem:[%s1] sm:$0xf]
  %v19 = vld [vmem:[%s1 + $0x4] sm:$0xf]
  %v20 = vld [vmem:[%s1 + $0x8] sm:$0xf]
  %v21 = vld [vmem:[%s1 + $0xc] sm:$0xf]
  %v22 = vld [vmem:[%s2] sm:$0x1]
  %v24 = vlaneseq
  %v25 = vshrl.u32 %v24, 7
  %v26 = vsub.s32 0, %v25
  %v27 = vrot.slane %v22, %v26
  %v33 = vunpack.c.l.b16 %v18
  %v34 = vunpack.c.l.b16 %v19
  %v35 = vunpack.c.l.b16 %v20
  %v36 = vunpack.c.l.b16 %v21
  %v37 = vpack.c.b16 %v34, %v33
  %v38 = vpack.c.b16 %v36, %v35
  %vm41 = vcmask 261120
  %v43 = vsel %vm41, %v17, 0
  %45 = vmatprep.subr.bf16.mxu0 0
  %46 = vmatpush1.bf16.msra.mxu0 0
  %47 = vmatprep.subr.bf16.mxu0 0
  %48 = vmatpush1.bf16.msra.mxu0 0
  %49 = vmatprep.subr.bf16.mxu0 0
  %50 = vmatpush1.bf16.msra.mxu0 0
  %51 = vmatprep.subr.bf16.mxu0 0
  %52 = vmatpush1.bf16.msra.mxu0 0
  %53 = vmatprep.subr.bf16.mxu0 0
  %54 = vmatpush1.bf16.msra.mxu0 0
  %55 = vmatprep.subr.bf16.mxu0 0
  %56 = vmatpush1.bf16.msra.mxu0 0
  %57 = vmatprep.subr.bf16.mxu0 0
  %58 = vmatpush1.bf16.msra.mxu0 %v38
  %59 = vmatprep.subr.bf16.mxu0 0
  %60 = vmatpush1.bf16.msra.mxu0 %v37
  %61 = vmatprep.subr.bf16.mxu0 0
  %62 = vmatpush2.bf16.msra.mxu0 0
  %63 = vmatprep.subr.bf16.mxu0 0
  %64 = vmatpush2.bf16.msra.mxu0 0
  %65 = vmatprep.subr.bf16.mxu0 0
  %66 = vmatpush2.bf16.msra.mxu0 0
  %67 = vmatprep.subr.bf16.mxu0 0
  %68 = vmatpush2.bf16.msra.mxu0 0
  %69 = vmatprep.subr.bf16.mxu0 0
  %70 = vmatpush2.bf16.msra.mxu0 0
  %71 = vmatprep.subr.bf16.mxu0 0
  %72 = vmatpush2.bf16.msra.mxu0 0
  %73 = vmatprep.subr.bf16.mxu0 0
  %74 = vmatpush2.bf16.msra.mxu0 0
  %75 = vmatprep.subr.bf16.mxu0 0
  %76 = vmatpush2.bf16.msra.mxu0 0
  %77 = vmatprep.mubr.bf16.mxu0 0
  %78 = vmatmul.mubr.bf16.gmra.mxu0 %v43
  %v79 = vpop.f32.mrf.mxu0
  %v80 = vadd.f32 %v27, %v79
  %v81 = vpop.f32.mrf.mxu0
  %v82 = vpop.f32.mrf.mxu0
  %v83 = vadd.f32 %v27, %v82
  %v84 = vpop.f32.mrf.mxu0
  %85 = vdwg.mxu0
  %vm86 = vcmask 785408
  %87 = vst.msk [vmem:[%s3] sm:$0xff] %vm86, %v80
  %88 = vst.msk [vmem:[%s3 + $0x8] sm:$0xff] %vm86, %v83
  // Predicated region
  $region14: #{_lambda_.12} parent=0 // pred_check
    _
  $region15: #{_lambda_.12} parent=0 // pred_check_branch
    %90 = sbr.rel (0) target = $region17
  $region16: #{_lambda_.12} parent=0 // pred_region
    _
  $region17: #{_lambda_.12} parent=0 // pred_fallthru
    _
  // Predicated region
  $region18: #{_lambda_.12} parent=0 // pred_check
    _
  $region19: #{_lambda_.12} parent=0 // pred_check_branch
    %92 = sbr.rel (0) target = $region21
  $region20: #{_lambda_.12} parent=0 // pred_region
    _
  $region21: #{_lambda_.12} parent=0 // pred_fallthru
    _

// kernel: _lambda_.13
$region0: #{_lambda_.13}
  #allocation0 [shape = 'u32[]', space=smem, size = 0x4, offset = 0x4, fixed_abs, tag = 'smem constant byte address 0x4 - core index']
  #allocation1 [shape = 'u32[144,128]{1,0:T(1,128)}', space=vmem, size = 0x12000, scoped, tag = 'internal scratch']
  %s0 = inlined_call_operand.vmem [shape: f32[2,4,8,8], index: 0, kind: input, shape index: {}]
  %s1 = inlined_call_operand.vmem [shape: f32[2,4,8,8], index: 1, kind: input, shape index: {}]
  %s2 = inlined_call_operand.vmem [shape: f32[2,4,8,8], index: 2, kind: input, shape index: {}]
  %s3 = inlined_call_operand.vmem [shape: f32[2,1,8], index: 3, kind: input, shape index: {}]
  %s4 = inlined_call_operand.vmem [shape: f32[2,4,8,8], index: 4, kind: output, shape index: {}]
  %s5 = sld [smem:[#allocation0]]
  $region49: #{_lambda_.13} parent=0
    _
  %s7 = ssub.s32 1, %s5
  %s8 = scalar_select 0, %s7, %s5
  loop: start=0, step=1, limit=4
  $region2: #{_lambda_.13} parent=0 // loop_pre_header
    _
  $region3: #{_lambda_.13} parent=0 // loop_header
    %s10 = sphi 0, %s14
    %p11 = scmp.ge.s32.totalorder %s10, 4
    %s20 = sphi 0, %s22
    %s23 = sphi 0, %s20
    %s24 = sphi 0, %s23
    %s40 = sphi 0, %s24
    %s46 = sphi 0, %s48
    %s49 = sphi 0, %s46
    %s50 = sphi 0, %s49
    %s66 = sphi 0, %s50
    %s72 = sphi 0, %s74
    %s75 = sphi 0, %s72
    %s76 = sphi 0, %s75
    %s92 = sphi 0, %s76
    %s98 = sphi 0, %s100
    %s101 = sphi 0, %s98
    %s102 = sphi 0, %s101
    %s118 = sphi 0, %s102
    %s124 = sphi 0, %s126
    %s127 = sphi 0, %s124
    %s128 = sphi 0, %s127
    %s144 = sphi 0, %s128
  $region4: #{_lambda_.13} parent=0 // loop_header_branch
    %13 = sbr.rel (%p11) target = $region8
  $region5: #{_lambda_.13} parent=0 // loop_body
    %s15 = ssub.s32 %s10, 1
    %s16 = ssub.s32 %s10, 2
    %s17 = sadd.s32 %s10, 1
    %s18 = ssub.s32 %s10, %s17
    %p19 = scmp.eq.s32.totalorder %s18, 0
    %s21 = sadd.s32 %s20, 1
    %s22 = scalar_select %p19, %s20, %s21
    %p25 = pneg %p19
    %p26 = scmp.eq.s32.totalorder %s10, 1
    %p27 = por %p25, %p26
    %p28 = scmp.ne.s32.totalorder %s20, %s23
    %p29 = scmp.eq.s32.totalorder %s10, 0
    %p30 = por %p28, %p29
    %p31 = scmp.ne.s32.totalorder %s20, %s23
    %p32 = scmp.eq.s32.totalorder %s15, 1
    %p33 = por %p31, %p32
    %p34 = scmp.ne.s32.totalorder %s23, %s24
    %p35 = scmp.eq.s32.totalorder %s15, 0
    %p36 = por %p34, %p35
    %p37 = scmp.ne.s32.totalorder %s23, %s24
    %p38 = scmp.eq.s32.totalorder %s16, 1
    %p39 = por %p37, %p38
    %p41 = scmp.ne.s32.totalorder %s24, %s40
    %p42 = scmp.eq.s32.totalorder %s16, 0
    %p43 = por %p41, %p42
    %s44 = ssub.s32 %s10, %s17
    %p45 = scmp.eq.s32.totalorder %s44, 0
    %s47 = sadd.s32 %s46, 1
    %s48 = scalar_select %p45, %s46, %s47
    %p51 = pneg %p45
    %p52 = scmp.eq.s32.totalorder %s10, 1
    %p53 = por %p51, %p52
    %p54 = scmp.ne.s32.totalorder %s46, %s49
    %p55 = scmp.eq.s32.totalorder %s10, 0
    %p56 = por %p54, %p55
    %p57 = scmp.ne.s32.totalorder %s46, %s49
    %p58 = scmp.eq.s32.totalorder %s15, 1
    %p59 = por %p57, %p58
    %p60 = scmp.ne.s32.totalorder %s49, %s50
    %p61 = scmp.eq.s32.totalorder %s15, 0
    %p62 = por %p60, %p61
    %p63 = scmp.ne.s32.totalorder %s49, %s50
    %p64 = scmp.eq.s32.totalorder %s16, 1
    %p65 = por %p63, %p64
    %p67 = scmp.ne.s32.totalorder %s50, %s66
    %p68 = scmp.eq.s32.totalorder %s16, 0
    %p69 = por %p67, %p68
    %s70 = ssub.s32 %s10, %s17
    %p71 = scmp.eq.s32.totalorder %s70, 0
    %s73 = sadd.s32 %s72, 1
    %s74 = scalar_select %p71, %s72, %s73
    %p77 = pneg %p71
    %p78 = scmp.eq.s32.totalorder %s10, 1
    %p79 = por %p77, %p78
    %p80 = scmp.ne.s32.totalorder %s72, %s75
    %p81 = scmp.eq.s32.totalorder %s10, 0
    %p82 = por %p80, %p81
    %p83 = scmp.ne.s32.totalorder %s72, %s75
    %p84 = scmp.eq.s32.totalorder %s15, 1
    %p85 = por %p83, %p84
    %p86 = scmp.ne.s32.totalorder %s75, %s76
    %p87 = scmp.eq.s32.totalorder %s15, 0
    %p88 = por %p86, %p87
    %p89 = scmp.ne.s32.totalorder %s75, %s76
    %p90 = scmp.eq.s32.totalorder %s16, 1
    %p91 = por %p89, %p90
    %p93 = scmp.ne.s32.totalorder %s76, %s92
    %p94 = scmp.eq.s32.totalorder %s16, 0
    %p95 = por %p93, %p94
    %s96 = ssub.s32 %s10, %s17
    %p97 = scmp.eq.s32.totalorder %s96, 0
    %s99 = sadd.s32 %s98, 1
    %s100 = scalar_select %p97, %s98, %s99
    %p103 = pneg %p97
    %p104 = scmp.eq.s32.totalorder %s10, 1
    %p105 = por %p103, %p104
    %p106 = scmp.ne.s32.totalorder %s98, %s101
    %p107 = scmp.eq.s32.totalorder %s10, 0
    %p108 = por %p106, %p107
    %p109 = scmp.ne.s32.totalorder %s98, %s101
    %p110 = scmp.eq.s32.totalorder %s15, 1
    %p111 = por %p109, %p110
    %p112 = scmp.ne.s32.totalorder %s101, %s102
    %p113 = scmp.eq.s32.totalorder %s15, 0
    %p114 = por %p112, %p113
    %p115 = scmp.ne.s32.totalorder %s101, %s102
    %p116 = scmp.eq.s32.totalorder %s16, 1
    %p117 = por %p115, %p116
    %p119 = scmp.ne.s32.totalorder %s102, %s118
    %p120 = scmp.eq.s32.totalorder %s16, 0
    %p121 = por %p119, %p120
    %s122 = ssub.s32 %s10, %s17
    %p123 = scmp.eq.s32.totalorder %s122, 0
    %s125 = sadd.s32 %s124, 1
    %s126 = scalar_select %p123, %s124, %s125
    %p129 = pneg %p123
    %p130 = scmp.eq.s32.totalorder %s10, 1
    %p131 = por %p129, %p130
    %p132 = scmp.ne.s32.totalorder %s124, %s127
    %p133 = scmp.eq.s32.totalorder %s10, 0
    %p134 = por %p132, %p133
    %p135 = scmp.ne.s32.totalorder %s124, %s127
    %p136 = scmp.eq.s32.totalorder %s15, 1
    %p137 = por %p135, %p136
    %p138 = scmp.ne.s32.totalorder %s127, %s128
    %p139 = scmp.eq.s32.totalorder %s15, 0
    %p140 = por %p138, %p139
    %p141 = scmp.ne.s32.totalorder %s127, %s128
    %p142 = scmp.eq.s32.totalorder %s16, 1
    %p143 = por %p141, %p142
    %p145 = scmp.ne.s32.totalorder %s128, %s144
    %p146 = scmp.eq.s32.totalorder %s16, 0
    %p147 = por %p145, %p146
    %p148 = scmp.le.s32.totalorder 1, %s10
    %p149 = scmp.lt.s32.totalorder %s10, 3
    %p150 = pnand %p148, %p149
    %p151 = pneg %p150
    // Predicated region
    $region9: #{_lambda_.13} parent=5 // pred_check
      _
    $region10: #{_lambda_.13} parent=5 // pred_check_branch
      %153 = sbr.rel (%p150) target = $region12
    $region11: #{_lambda_.13} parent=5 // pred_region
      %s154 = ssub.s32 %s10, 1
    $region12: #{_lambda_.13} parent=5 // pred_fallthru
      _
    %p155 = scmp.lt.s32.totalorder %s10, 2
    // Predicated region
    $region13: #{_lambda_.13} parent=5 // pred_check
      %p156 = pneg %p155
    $region14: #{_lambda_.13} parent=5 // pred_check_branch
      %158 = sbr.rel (%p156) target = $region16
    $region15: #{_lambda_.13} parent=5 // pred_region
      // Predicated region
      $region17: #{_lambda_.13} parent=15 // pred_check
        %p159 = pneg %p30
      $region18: #{_lambda_.13} parent=15 // pred_check_branch
        %161 = sbr.rel (%p159) target = $region20
      $region19: #{_lambda_.13} parent=15 // pred_region
        %p162 = scmp.lt.s32.totalorder %s10, 1
        %s163 = scalar_select %p162, %s10, 1
        %s164 = smul.addr %s163, 4
        %s165 = smul.addr %s164, 8
        %s166 = scalar_lea.vmem %s0, %s165
      $region20: #{_lambda_.13} parent=15 // pred_fallthru
        _
      // Predicated region
      $region21: #{_lambda_.13} parent=15 // pred_check
        %p167 = pneg %p56
      $region22: #{_lambda_.13} parent=15 // pred_check_branch
        %169 = sbr.rel (%p167) target = $region24
      $region23: #{_lambda_.13} parent=15 // pred_region
        %p170 = scmp.lt.s32.totalorder %s10, 1
        %s171 = scalar_select %p170, %s10, 1
        %s172 = smul.addr %s171, 4
        %s173 = smul.addr %s172, 8
        %s174 = scalar_lea.vmem %s1, %s173
      $region24: #{_lambda_.13} parent=15 // pred_fallthru
        _
      // Predicated region
      $region25: #{_lambda_.13} parent=15 // pred_check
        %p175 = pneg %p82
      $region26: #{_lambda_.13} parent=15 // pred_check_branch
        %177 = sbr.rel (%p175) target = $region28
      $region27: #{_lambda_.13} parent=15 // pred_region
        %p178 = scmp.lt.s32.totalorder %s10, 1
        %s179 = scalar_select %p178, %s10, 1
        %s180 = smul.addr %s179, 4
        %s181 = smul.addr %s180, 8
        %s182 = scalar_lea.vmem %s2, %s181
      $region28: #{_lambda_.13} parent=15 // pred_fallthru
        _
      // Predicated region
      $region29: #{_lambda_.13} parent=15 // pred_check
        %p183 = pneg %p108
      $region30: #{_lambda_.13} parent=15 // pred_check_branch
        %185 = sbr.rel (%p183) target = $region32
      $region31: #{_lambda_.13} parent=15 // pred_region
        %p186 = scmp.lt.s32.totalorder %s10, 1
        %s187 = scalar_select %p186, %s10, 1
        %s188 = scalar_lea.vmem %s3, %s187
      $region32: #{_lambda_.13} parent=15 // pred_fallthru
        _
    $region16: #{_lambda_.13} parent=5 // pred_fallthru
      _
    %p189 = scmp.le.s32.totalorder 1, %s10
    %p190 = scmp.lt.s32.totalorder %s10, 3
    %p191 = pnand %p189, %p190
    %p192 = pneg %p191
    // Predicated region
    $region33: #{_lambda_.13} parent=5 // pred_check
      _
    $region34: #{_lambda_.13} parent=5 // pred_check_branch
      %194 = sbr.rel (%p191) target = $region36
    $region35: #{_lambda_.13} parent=5 // pred_region
      %s195 = ssub.s32 %s10, 1
      %p196 = scmp.lt.s32.totalorder %s15, 1
      %s197 = scalar_select %p196, %s15, 1
      %s198 = smul.addr %s197, 4
      %s199 = smul.addr %s198, 8
      %s200 = scalar_lea.vmem %s0, %s199
      %p201 = pneg %p36
      %p202 = pneg %p33
      %p203 = scmp.lt.s32.totalorder %s15, 1
      %s204 = scalar_select %p203, %s15, 1
      %s205 = smul.addr %s204, 4
      %s206 = smul.addr %s205, 8
      %s207 = scalar_lea.vmem %s1, %s206
      %p208 = pneg %p62
      %p209 = pneg %p59
      %p210 = scmp.lt.s32.totalorder %s15, 1
      %s211 = scalar_select %p210, %s15, 1
      %s212 = smul.addr %s211, 4
      %s213 = smul.addr %s212, 8
      %s214 = scalar_lea.vmem %s2, %s213
      %p215 = pneg %p88
      %p216 = pneg %p85
      %p217 = scmp.lt.s32.totalorder %s15, 1
      %s218 = scalar_select %p217, %s15, 1
      %s219 = scalar_lea.vmem %s3, %s218
      %p220 = pneg %p114
      %p221 = pneg %p111
      %p222 = pneg %p140
      %p223 = pneg %p137
      %p224 = scmp.lt.s32.totalorder %s15, 1
      %s225 = scalar_select %p224, %s15, 1
      %s226 = smul.addr %s225, 4
      %s227 = smul.addr %s226, 8
      %s228 = scalar_lea.vmem %s4, %s227
      %p229 = scmp.lt.s32.totalorder %s15, 1
      %s230 = scalar_select %p229, %s15, 1
      %s231 = smul.addr %s230, 4
      %s232 = smul.addr %s231, 8
      %s233 = scalar_lea.vmem %s0, %s232
      %p234 = scmp.lt.s32.totalorder %s15, 1
      %s235 = scalar_select %p234, %s15, 1
      %s236 = smul.addr %s235, 4
      %s237 = smul.addr %s236, 8
      %s238 = scalar_lea.vmem %s1, %s237
      %p239 = scmp.lt.s32.totalorder %s15, 1
      %s240 = scalar_select %p239, %s15, 1
      %s241 = smul.addr %s240, 4
      %s242 = smul.addr %s241, 8
      %s243 = scalar_lea.vmem %s2, %s242
      %p244 = scmp.lt.s32.totalorder %s15, 1
      %s245 = scalar_select %p244, %s15, 1
      %s246 = scalar_lea.vmem %s3, %s245
      %p247 = scmp.lt.s32.totalorder %s15, 1
      %s248 = scalar_select %p247, %s15, 1
      %s249 = smul.addr %s248, 4
      %s250 = smul.addr %s249, 8
      %s251 = scalar_lea.vmem %s4, %s250
      %v253 = vld [vmem:[%s233] sm:$0xff]
      %v254 = vld [vmem:[%s233 + $0x8] sm:$0xff]
      %v255 = vld [vmem:[%s233 + $0x10] sm:$0xff]
      %v256 = vld [vmem:[%s233 + $0x18] sm:$0xff]
      %v257 = vpack.c.bf16 %v253, %v253
      %v258 = vpack.c.bf16 %v254, %v254
      %v259 = vpack.c.bf16 %v255, %v255
      %v260 = vpack.c.bf16 %v256, %v256
      %v261 = vld [vmem:[%s238] sm:$0xff]
      %v262 = vld [vmem:[%s238 + $0x8] sm:$0xff]
      %v263 = vld [vmem:[%s238 + $0x10] sm:$0xff]
      %v264 = vld [vmem:[%s238 + $0x18] sm:$0xff]
      %v265 = vpack.c.bf16 %v261, %v261
      %v266 = vpack.c.bf16 %v262, %v262
      %v267 = vpack.c.bf16 %v263, %v263
      %v268 = vpack.c.bf16 %v264, %v264
      %v269 = vld [vmem:[%s243] sm:$0xff]
      %v270 = vld [vmem:[%s243 + $0x8] sm:$0xff]
      %v271 = vld [vmem:[%s243 + $0x10] sm:$0xff]
      %v272 = vld [vmem:[%s243 + $0x18] sm:$0xff]
      %v273 = vpack.c.bf16 %v269, %v269
      %v274 = vpack.c.bf16 %v270, %v270
      %v275 = vpack.c.bf16 %v271, %v271
      %v276 = vpack.c.bf16 %v272, %v272
      %v277 = vld [vmem:[%s246] sm:$0x1]
      %v279 = vlaneseq
      %v280 = vshrl.u32 %v279, 7
      %v281 = vsub.s32 0, %v280
      %v282 = vrot.slane %v277, %v281
      %vm284 = vcmask 64512
      %v286 = vsel %vm284, %v257, 0
      %v289 = vsel %vm284, %v265, 0
      %291 = vmatprep.subr.bf16.mxu0 0
      %292 = vmatpush1.bf16.xpose.msra.mxu0 0
      %293 = vmatprep.subr.bf16.mxu0 0
      %294 = vmatpush1.bf16.xpose.msra.mxu0 0
      %295 = vmatprep.subr.bf16.mxu0 0
      %296 = vmatpush1.bf16.xpose.msra.mxu0 0
      %297 = vmatprep.subr.bf16.mxu0 0
      %298 = vmatpush1.bf16.xpose.msra.mxu0 0
      %299 = vmatprep.subr.bf16.mxu0 0
      %300 = vmatpush1.bf16.xpose.msra.mxu0 0
      %301 = vmatprep.subr.bf16.mxu0 0
      %302 = vmatpush1.bf16.xpose.msra.mxu0 0
      %303 = vmatprep.subr.bf16.mxu0 0
      %304 = vmatpush1.bf16.xpose.msra.mxu0 0
      %305 = vmatprep.subr.bf16.mxu0 0
      %306 = vmatpush1.bf16.xpose.msra.mxu0 %v289
      %307 = vmatprep.subr.bf16.mxu0 0
      %308 = vmatpush2.bf16.xpose.msra.mxu0 0
      %309 = vmatprep.subr.bf16.mxu0 0
      %310 = vmatpush2.bf16.xpose.msra.mxu0 0
      %311 = vmatprep.subr.bf16.mxu0 0
      %312 = vmatpush2.bf16.xpose.msra.mxu0 0
      %313 = vmatprep.subr.bf16.mxu0 0
      %314 = vmatpush2.bf16.xpose.msra.mxu0 0
      %315 = vmatprep.subr.bf16.mxu0 0
      %316 = vmatpush2.bf16.xpose.msra.mxu0 0
      %317 = vmatprep.subr.bf16.mxu0 0
      %318 = vmatpush2.bf16.xpose.msra.mxu0 0
      %319 = vmatprep.subr.bf16.mxu0 0
      %320 = vmatpush2.bf16.xpose.msra.mxu0 0
      %321 = vmatprep.subr.bf16.mxu0 0
      %322 = vmatpush2.bf16.xpose.msra.mxu0 0
      %323 = vmatprep.mubr.bf16.mxu0 0
      %324 = vmatmul.mubr.bf16.gmra.mxu0 %v286
      %v325 = vpop.f32.mrf.mxu0
      %v326 = vadd.f32 %v282, %v325
      %v327 = vpop.f32.mrf.mxu0
      %v328 = vpop.f32.mrf.mxu0
      %v329 = vpop.f32.mrf.mxu0
      %330 = vdwg.mxu0
      %v332 = vsel %vm284, %v258, 0
      %v335 = vsel %vm284, %v266, 0
      %337 = vmatprep.subr.bf16.mxu0 0
      %338 = vmatpush1.bf16.xpose.msra.mxu0 0
      %339 = vmatprep.subr.bf16.mxu0 0
      %340 = vmatpush1.bf16.xpose.msra.mxu0 0
      %341 = vmatprep.subr.bf16.mxu0 0
      %342 = vmatpush1.bf16.xpose.msra.mxu0 0
      %343 = vmatprep.subr.bf16.mxu0 0
      %344 = vmatpush1.bf16.xpose.msra.mxu0 0
      %345 = vmatprep.subr.bf16.mxu0 0
      %346 = vmatpush1.bf16.xpose.msra.mxu0 0
      %347 = vmatprep.subr.bf16.mxu0 0
      %348 = vmatpush1.bf16.xpose.msra.mxu0 0
      %349 = vmatprep.subr.bf16.mxu0 0
      %350 = vmatpush1.bf16.xpose.msra.mxu0 0
      %351 = vmatprep.subr.bf16.mxu0 0
      %352 = vmatpush1.bf16.xpose.msra.mxu0 %v335
      %353 = vmatprep.subr.bf16.mxu0 0
      %354 = vmatpush2.bf16.xpose.msra.mxu0 0
      %355 = vmatprep.subr.bf16.mxu0 0
      %356 = vmatpush2.bf16.xpose.msra.mxu0 0
      %357 = vmatprep.subr.bf16.mxu0 0
      %358 = vmatpush2.bf16.xpose.msra.mxu0 0
      %359 = vmatprep.subr.bf16.mxu0 0
      %360 = vmatpush2.bf16.xpose.msra.mxu0 0
      %361 = vmatprep.subr.bf16.mxu0 0
      %362 = vmatpush2.bf16.xpose.msra.mxu0 0
      %363 = vmatprep.subr.bf16.mxu0 0
      %364 = vmatpush2.bf16.xpose.msra.mxu0 0
      %365 = vmatprep.subr.bf16.mxu0 0
      %366 = vmatpush2.bf16.xpose.msra.mxu0 0
      %367 = vmatprep.subr.bf16.mxu0 0
      %368 = vmatpush2.bf16.xpose.msra.mxu0 0
      %369 = vmatprep.mubr.bf16.mxu0 0
      %370 = vmatmul.mubr.bf16.gmra.mxu0 %v332
      %v371 = vpop.f32.mrf.mxu0
      %v372 = vadd.f32 %v282, %v371
      %v373 = vpop.f32.mrf.mxu0
      %v374 = vpop.f32.mrf.mxu0
      %v375 = vpop.f32.mrf.mxu0
      %376 = vdwg.mxu0
      %v378 = vsel %vm284, %v259, 0
      %v381 = vsel %vm284, %v267, 0
      %383 = vmatprep.subr.bf16.mxu0 0
      %384 = vmatpush1.bf16.xpose.msra.mxu0 0
      %385 = vmatprep.subr.bf16.mxu0 0
      %386 = vmatpush1.bf16.xpose.msra.mxu0 0
      %387 = vmatprep.subr.bf16.mxu0 0
      %388 = vmatpush1.bf16.xpose.msra.mxu0 0
      %389 = vmatprep.subr.bf16.mxu0 0
      %390 = vmatpush1.bf16.xpose.msra.mxu0 0
      %391 = vmatprep.subr.bf16.mxu0 0
      %392 = vmatpush1.bf16.xpose.msra.mxu0 0
      %393 = vmatprep.subr.bf16.mxu0 0
      %394 = vmatpush1.bf16.xpose.msra.mxu0 0
      %395 = vmatprep.subr.bf16.mxu0 0
      %396 = vmatpush1.bf16.xpose.msra.mxu0 0
      %397 = vmatprep.subr.bf16.mxu0 0
      %398 = vmatpush1.bf16.xpose.msra.mxu0 %v381
      %399 = vmatprep.subr.bf16.mxu0 0
      %400 = vmatpush2.bf16.xpose.msra.mxu0 0
      %401 = vmatprep.subr.bf16.mxu0 0
      %402 = vmatpush2.bf16.xpose.msra.mxu0 0
      %403 = vmatprep.subr.bf16.mxu0 0
      %404 = vmatpush2.bf16.xpose.msra.mxu0 0
      %405 = vmatprep.subr.bf16.mxu0 0
      %406 = vmatpush2.bf16.xpose.msra.mxu0 0
      %407 = vmatprep.subr.bf16.mxu0 0
      %408 = vmatpush2.bf16.xpose.msra.mxu0 0
      %409 = vmatprep.subr.bf16.mxu0 0
      %410 = vmatpush2.bf16.xpose.msra.mxu0 0
      %411 = vmatprep.subr.bf16.mxu0 0
      %412 = vmatpush2.bf16.xpose.msra.mxu0 0
      %413 = vmatprep.subr.bf16.mxu0 0
      %414 = vmatpush2.bf16.xpose.msra.mxu0 0
      %415 = vmatprep.mubr.bf16.mxu0 0
      %416 = vmatmul.mubr.bf16.gmra.mxu0 %v378
      %v417 = vpop.f32.mrf.mxu0
      %v418 = vadd.f32 %v282, %v417
      %v419 = vpop.f32.mrf.mxu0
      %v420 = vpop.f32.mrf.mxu0
      %v421 = vpop.f32.mrf.mxu0
      %422 = vdwg.mxu0
      %v424 = vsel %vm284, %v260, 0
      %v427 = vsel %vm284, %v268, 0
      %429 = vmatprep.subr.bf16.mxu0 0
      %430 = vmatpush1.bf16.xpose.msra.mxu0 0
      %431 = vmatprep.subr.bf16.mxu0 0
      %432 = vmatpush1.bf16.xpose.msra.mxu0 0
      %433 = vmatprep.subr.bf16.mxu0 0
      %434 = vmatpush1.bf16.xpose.msra.mxu0 0
      %435 = vmatprep.subr.bf16.mxu0 0
      %436 = vmatpush1.bf16.xpose.msra.mxu0 0
      %437 = vmatprep.subr.bf16.mxu0 0
      %438 = vmatpush1.bf16.xpose.msra.mxu0 0
      %439 = vmatprep.subr.bf16.mxu0 0
      %440 = vmatpush1.bf16.xpose.msra.mxu0 0
      %441 = vmatprep.subr.bf16.mxu0 0
      %442 = vmatpush1.bf16.xpose.msra.mxu0 0
      %443 = vmatprep.subr.bf16.mxu0 0
      %444 = vmatpush1.bf16.xpose.msra.mxu0 %v427
      %445 = vmatprep.subr.bf16.mxu0 0
      %446 = vmatpush2.bf16.xpose.msra.mxu0 0
      %447 = vmatprep.subr.bf16.mxu0 0
      %448 = vmatpush2.bf16.xpose.msra.mxu0 0
      %449 = vmatprep.subr.bf16.mxu0 0
      %450 = vmatpush2.bf16.xpose.msra.mxu0 0
      %451 = vmatprep.subr.bf16.mxu0 0
      %452 = vmatpush2.bf16.xpose.msra.mxu0 0
      %453 = vmatprep.subr.bf16.mxu0 0
      %454 = vmatpush2.bf16.xpose.msra.mxu0 0
      %455 = vmatprep.subr.bf16.mxu0 0
      %456 = vmatpush2.bf16.xpose.msra.mxu0 0
      %457 = vmatprep.subr.bf16.mxu0 0
      %458 = vmatpush2.bf16.xpose.msra.mxu0 0
      %459 = vmatprep.subr.bf16.mxu0 0
      %460 = vmatpush2.bf16.xpose.msra.mxu0 0
      %461 = vmatprep.mubr.bf16.mxu0 0
      %462 = vmatmul.mubr.bf16.gmra.mxu0 %v424
      %v463 = vpop.f32.mrf.mxu0
      %v464 = vadd.f32 %v282, %v463
      %v465 = vpop.f32.mrf.mxu0
      %v466 = vpop.f32.mrf.mxu0
      %v467 = vpop.f32.mrf.mxu0
      %468 = vdwg.mxu0
      %v469 = vsel %vm284, %v326, -inf
      %470 = vmax.xlane.f32.xlu0 %v469
      %v471 = vpop.xlane.xlu0 %470
      %v472 = vsel %vm284, %v372, -inf
      %473 = vmax.xlane.f32.xlu0 %v472
      %v474 = vpop.xlane.xlu0 %473
      %v475 = vsel %vm284, %v418, -inf
      %476 = vmax.xlane.f32.xlu0 %v475
      %v477 = vpop.xlane.xlu0 %476
      %v478 = vsel %vm284, %v464, -inf
      %479 = vmax.xlane.f32.xlu0 %v478
      %v480 = vpop.xlane.xlu0 %479
      %v481 = vsub.f32 %v326, %v471
      %v482 = vsub.f32 %v372, %v474
      %v483 = vsub.f32 %v418, %v477
      %v484 = vsub.f32 %v464, %v480
      %v485 = vmul.f32 %v481, 1.442695
      %v486 = vpow.pop %v485
      %v487 = vmul.f32 %v482, 1.442695
      %v488 = vpow.pop %v487
      %v489 = vmul.f32 %v483, 1.442695
      %v490 = vpow.pop %v489
      %v491 = vmul.f32 %v484, 1.442695
      %v492 = vpow.pop %v491
      %v493 = vsel %vm284, %v486, 0.0
      %494 = vadd.xlane.f32.xlu0 %v493
      %v495 = vpop.xlane.xlu0 %494
      %v496 = vsel %vm284, %v488, 0.0
      %497 = vadd.xlane.f32.xlu0 %v496
      %v498 = vpop.xlane.xlu0 %497
      %v499 = vsel %vm284, %v490, 0.0
      %500 = vadd.xlane.f32.xlu0 %v499
      %v501 = vpop.xlane.xlu0 %500
      %v502 = vsel %vm284, %v492, 0.0
      %503 = vadd.xlane.f32.xlu0 %v502
      %v504 = vpop.xlane.xlu0 %503
      %v505 = vrcp.pop %v495
      %v506 = vrcp.pop %v498
      %v507 = vrcp.pop %v501
      %v508 = vrcp.pop %v504
      %v509 = vmul.f32 %v486, %v505
      %v510 = vmul.f32 %v488, %v506
      %v511 = vmul.f32 %v490, %v507
      %v512 = vmul.f32 %v492, %v508
      %v513 = vpack.c.bf16 %v509, %v509
      %v514 = vpack.c.bf16 %v510, %v510
      %v515 = vpack.c.bf16 %v511, %v511
      %v516 = vpack.c.bf16 %v512, %v512
      %v518 = vsel %vm284, %v513, 0
      %vm520 = vcmask 1043456
      %v522 = vsel %vm520, %v273, 0
      %524 = vmatprep.subr.bf16.mxu0 0
      %525 = vmatpush1.bf16.msra.mxu0 0
      %526 = vmatprep.subr.bf16.mxu0 0
      %527 = vmatpush1.bf16.msra.mxu0 0
      %528 = vmatprep.subr.bf16.mxu0 0
      %529 = vmatpush1.bf16.msra.mxu0 0
      %530 = vmatprep.subr.bf16.mxu0 0
      %531 = vmatpush1.bf16.msra.mxu0 0
      %532 = vmatprep.subr.bf16.mxu0 0
      %533 = vmatpush1.bf16.msra.mxu0 0
      %534 = vmatprep.subr.bf16.mxu0 0
      %535 = vmatpush1.bf16.msra.mxu0 0
      %536 = vmatprep.subr.bf16.mxu0 0
      %537 = vmatpush1.bf16.msra.mxu0 0
      %538 = vmatprep.subr.bf16.mxu0 0
      %539 = vmatpush1.bf16.msra.mxu0 %v522
      %540 = vmatprep.subr.bf16.mxu0 0
      %541 = vmatpush2.bf16.msra.mxu0 0
      %542 = vmatprep.subr.bf16.mxu0 0
      %543 = vmatpush2.bf16.msra.mxu0 0
      %544 = vmatprep.subr.bf16.mxu0 0
      %545 = vmatpush2.bf16.msra.mxu0 0
      %546 = vmatprep.subr.bf16.mxu0 0
      %547 = vmatpush2.bf16.msra.mxu0 0
      %548 = vmatprep.subr.bf16.mxu0 0
      %549 = vmatpush2.bf16.msra.mxu0 0
      %550 = vmatprep.subr.bf16.mxu0 0
      %551 = vmatpush2.bf16.msra.mxu0 0
      %552 = vmatprep.subr.bf16.mxu0 0
      %553 = vmatpush2.bf16.msra.mxu0 0
      %554 = vmatprep.subr.bf16.mxu0 0
      %555 = vmatpush2.bf16.msra.mxu0 0
      %556 = vmatprep.mubr.bf16.mxu0 0
      %557 = vmatmul.mubr.bf16.gmra.mxu0 %v518
      %v558 = vpop.f32.mrf.mxu0
      %v559 = vadd.f32 0.0, %v558
      %v560 = vpop.f32.mrf.mxu0
      %v561 = vpop.f32.mrf.mxu0
      %v562 = vpop.f32.mrf.mxu0
      %563 = vdwg.mxu0
      %v565 = vsel %vm284, %v514, 0
      %v568 = vsel %vm520, %v274, 0
      %570 = vmatprep.subr.bf16.mxu0 0
      %571 = vmatpush1.bf16.msra.mxu0 0
      %572 = vmatprep.subr.bf16.mxu0 0
      %573 = vmatpush1.bf16.msra.mxu0 0
      %574 = vmatprep.subr.bf16.mxu0 0
      %575 = vmatpush1.bf16.msra.mxu0 0
      %576 = vmatprep.subr.bf16.mxu0 0
      %577 = vmatpush1.bf16.msra.mxu0 0
      %578 = vmatprep.subr.bf16.mxu0 0
      %579 = vmatpush1.bf16.msra.mxu0 0
      %580 = vmatprep.subr.bf16.mxu0 0
      %581 = vmatpush1.bf16.msra.mxu0 0
      %582 = vmatprep.subr.bf16.mxu0 0
      %583 = vmatpush1.bf16.msra.mxu0 0
      %584 = vmatprep.subr.bf16.mxu0 0
      %585 = vmatpush1.bf16.msra.mxu0 %v568
      %586 = vmatprep.subr.bf16.mxu0 0
      %587 = vmatpush2.bf16.msra.mxu0 0
      %588 = vmatprep.subr.bf16.mxu0 0
      %589 = vmatpush2.bf16.msra.mxu0 0
      %590 = vmatprep.subr.bf16.mxu0 0
      %591 = vmatpush2.bf16.msra.mxu0 0
      %592 = vmatprep.subr.bf16.mxu0 0
      %593 = vmatpush2.bf16.msra.mxu0 0
      %594 = vmatprep.subr.bf16.mxu0 0
      %595 = vmatpush2.bf16.msra.mxu0 0
      %596 = vmatprep.subr.bf16.mxu0 0
      %597 = vmatpush2.bf16.msra.mxu0 0
      %598 = vmatprep.subr.bf16.mxu0 0
      %599 = vmatpush2.bf16.msra.mxu0 0
      %600 = vmatprep.subr.bf16.mxu0 0
      %601 = vmatpush2.bf16.msra.mxu0 0
      %602 = vmatprep.mubr.bf16.mxu0 0
      %603 = vmatmul.mubr.bf16.gmra.mxu0 %v565
      %v604 = vpop.f32.mrf.mxu0
      %v605 = vadd.f32 0.0, %v604
      %v606 = vpop.f32.mrf.mxu0
      %v607 = vpop.f32.mrf.mxu0
      %v608 = vpop.f32.mrf.mxu0
      %609 = vdwg.mxu0
      %v611 = vsel %vm284, %v515, 0
      %v614 = vsel %vm520, %v275, 0
      %616 = vmatprep.subr.bf16.mxu0 0
      %617 = vmatpush1.bf16.msra.mxu0 0
      %618 = vmatprep.subr.bf16.mxu0 0
      %619 = vmatpush1.bf16.msra.mxu0 0
      %620 = vmatprep.subr.bf16.mxu0 0
      %621 = vmatpush1.bf16.msra.mxu0 0
      %622 = vmatprep.subr.bf16.mxu0 0
      %623 = vmatpush1.bf16.msra.mxu0 0
      %624 = vmatprep.subr.bf16.mxu0 0
      %625 = vmatpush1.bf16.msra.mxu0 0
      %626 = vmatprep.subr.bf16.mxu0 0
      %627 = vmatpush1.bf16.msra.mxu0 0
      %628 = vmatprep.subr.bf16.mxu0 0
      %629 = vmatpush1.bf16.msra.mxu0 0
      %630 = vmatprep.subr.bf16.mxu0 0
      %631 = vmatpush1.bf16.msra.mxu0 %v614
      %632 = vmatprep.subr.bf16.mxu0 0
      %633 = vmatpush2.bf16.msra.mxu0 0
      %634 = vmatprep.subr.bf16.mxu0 0
      %635 = vmatpush2.bf16.msra.mxu0 0
      %636 = vmatprep.subr.bf16.mxu0 0
      %637 = vmatpush2.bf16.msra.mxu0 0
      %638 = vmatprep.subr.bf16.mxu0 0
      %639 = vmatpush2.bf16.msra.mxu0 0
      %640 = vmatprep.subr.bf16.mxu0 0
      %641 = vmatpush2.bf16.msra.mxu0 0
      %642 = vmatprep.subr.bf16.mxu0 0
      %643 = vmatpush2.bf16.msra.mxu0 0
      %644 = vmatprep.subr.bf16.mxu0 0
      %645 = vmatpush2.bf16.msra.mxu0 0
      %646 = vmatprep.subr.bf16.mxu0 0
      %647 = vmatpush2.bf16.msra.mxu0 0
      %648 = vmatprep.mubr.bf16.mxu0 0
      %649 = vmatmul.mubr.bf16.gmra.mxu0 %v611
      %v650 = vpop.f32.mrf.mxu0
      %v651 = vadd.f32 0.0, %v650
      %v652 = vpop.f32.mrf.mxu0
      %v653 = vpop.f32.mrf.mxu0
      %v654 = vpop.f32.mrf.mxu0
      %655 = vdwg.mxu0
      %v657 = vsel %vm284, %v516, 0
      %v660 = vsel %vm520, %v276, 0
      %662 = vmatprep.subr.bf16.mxu0 0
      %663 = vmatpush1.bf16.msra.mxu0 0
      %664 = vmatprep.subr.bf16.mxu0 0
      %665 = vmatpush1.bf16.msra.mxu0 0
      %666 = vmatprep.subr.bf16.mxu0 0
      %667 = vmatpush1.bf16.msra.mxu0 0
      %668 = vmatprep.subr.bf16.mxu0 0
      %669 = vmatpush1.bf16.msra.mxu0 0
      %670 = vmatprep.subr.bf16.mxu0 0
      %671 = vmatpush1.bf16.msra.mxu0 0
      %672 = vmatprep.subr.bf16.mxu0 0
      %673 = vmatpush1.bf16.msra.mxu0 0
      %674 = vmatprep.subr.bf16.mxu0 0
      %675 = vmatpush1.bf16.msra.mxu0 0
      %676 = vmatprep.subr.bf16.mxu0 0
      %677 = vmatpush1.bf16.msra.mxu0 %v660
      %678 = vmatprep.subr.bf16.mxu0 0
      %679 = vmatpush2.bf16.msra.mxu0 0
      %680 = vmatprep.subr.bf16.mxu0 0
      %681 = vmatpush2.bf16.msra.mxu0 0
      %682 = vmatprep.subr.bf16.mxu0 0
      %683 = vmatpush2.bf16.msra.mxu0 0
      %684 = vmatprep.subr.bf16.mxu0 0
      %685 = vmatpush2.bf16.msra.mxu0 0
      %686 = vmatprep.subr.bf16.mxu0 0
      %687 = vmatpush2.bf16.msra.mxu0 0
      %688 = vmatprep.subr.bf16.mxu0 0
      %689 = vmatpush2.bf16.msra.mxu0 0
      %690 = vmatprep.subr.bf16.mxu0 0
      %691 = vmatpush2.bf16.msra.mxu0 0
      %692 = vmatprep.subr.bf16.mxu0 0
      %693 = vmatpush2.bf16.msra.mxu0 0
      %694 = vmatprep.mubr.bf16.mxu0 0
      %695 = vmatmul.mubr.bf16.gmra.mxu0 %v657
      %v696 = vpop.f32.mrf.mxu0
      %v697 = vadd.f32 0.0, %v696
      %v698 = vpop.f32.mrf.mxu0
      %v699 = vpop.f32.mrf.mxu0
      %v700 = vpop.f32.mrf.mxu0
      %701 = vdwg.mxu0
      %702 = vst.msk [vmem:[%s251] sm:$0xff] %vm284, %v559
      %703 = vst.msk [vmem:[%s251 + $0x8] sm:$0xff] %vm284, %v605
      %704 = vst.msk [vmem:[%s251 + $0x10] sm:$0xff] %vm284, %v651
      %705 = vst.msk [vmem:[%s251 + $0x18] sm:$0xff] %vm284, %v697
      %p706 = scmp.lt.s32.totalorder %s15, 1
      %s707 = scalar_select %p706, %s15, 1
      %s708 = smul.addr %s707, 4
      %s709 = smul.addr %s708, 8
      %s710 = scalar_lea.vmem %s4, %s709
      // Predicated region
      $region37: #{_lambda_.13} parent=35 // pred_check
        %p711 = pneg %p137
      $region38: #{_lambda_.13} parent=35 // pred_check_branch
        %713 = sbr.rel (%p711) target = $region40
      $region39: #{_lambda_.13} parent=35 // pred_region
        _
      $region40: #{_lambda_.13} parent=35 // pred_fallthru
        _
    $region36: #{_lambda_.13} parent=5 // pred_fallthru
      _
    %p714 = scmp.le.s32.totalorder 2, %s10
    // Predicated region
    $region41: #{_lambda_.13} parent=5 // pred_check
      %p715 = pneg %p714
    $region42: #{_lambda_.13} parent=5 // pred_check_branch
      %717 = sbr.rel (%p715) target = $region44
    $region43: #{_lambda_.13} parent=5 // pred_region
      %s718 = ssub.s32 %s10, 2
      // Predicated region
      $region45: #{_lambda_.13} parent=43 // pred_check
        %p719 = pneg %p143
      $region46: #{_lambda_.13} parent=43 // pred_check_branch
        %721 = sbr.rel (%p719) target = $region48
      $region47: #{_lambda_.13} parent=43 // pred_region
        %p722 = scmp.lt.s32.totalorder %s16, 1
        %s723 = scalar_select %p722, %s16, 1
        %s724 = smul.addr %s723, 4
        %s725 = smul.addr %s724, 8
        %s726 = scalar_lea.vmem %s4, %s725
      $region48: #{_lambda_.13} parent=43 // pred_fallthru
        _
    $region44: #{_lambda_.13} parent=5 // pred_fallthru
      _
  $region6: #{_lambda_.13} parent=0 // loop_footer
    %s14 = sadd.s32 1, %s10
  $region7: #{_lambda_.13} parent=0 // loop_footer_branch
    %9 = sbr.rel target = $region3
  $region8: #{_lambda_.13} parent=0 // loop_exit
    _

// kernel: _lambda_.14
$region0: #{_lambda_.14}
  #allocation0 [shape = 'u32[]', space=smem, size = 0x4, offset = 0x4, fixed_abs, tag = 'smem constant byte address 0x4 - core index']
  #allocation1 [shape = 'u32[144,128]{1,0:T(1,128)}', space=vmem, size = 0x12000, scoped, tag = 'internal scratch']
  %s0 = inlined_call_operand.vmem [shape: f32[16,32], index: 0, kind: input, shape index: {}]
  %s1 = inlined_call_operand.vmem [shape: bf16[32,32], index: 1, kind: input, shape index: {}]
  %s2 = inlined_call_operand.vmem [shape: f32[1,32], index: 2, kind: input, shape index: {}]
  %s3 = inlined_call_operand.vmem [shape: f32[16,32], index: 3, kind: input, shape index: {}]
  %s4 = inlined_call_operand.vmem [shape: f32[1,32], index: 4, kind: input, shape index: {}]
  %s5 = inlined_call_operand.vmem [shape: f32[1,32], index: 5, kind: input, shape index: {}]
  %s6 = inlined_call_operand.vmem [shape: f32[16,32], index: 6, kind: output, shape index: {}]
  %s7 = sld [smem:[#allocation0]]
  $region34: #{_lambda_.14} parent=0
    _
  %s9 = ssub.s32 1, %s7
  %s10 = scalar_select 0, %s9, %s7
  // Predicated region
  $region2: #{_lambda_.14} parent=0 // pred_check
    _
  $region3: #{_lambda_.14} parent=0 // pred_check_branch
    %12 = sbr.rel (0) target = $region5
  $region4: #{_lambda_.14} parent=0 // pred_region
    _
  $region5: #{_lambda_.14} parent=0 // pred_fallthru
    _
  // Predicated region
  $region6: #{_lambda_.14} parent=0 // pred_check
    _
  $region7: #{_lambda_.14} parent=0 // pred_check_branch
    %14 = sbr.rel (0) target = $region9
  $region8: #{_lambda_.14} parent=0 // pred_region
    _
  $region9: #{_lambda_.14} parent=0 // pred_fallthru
    _
  // Predicated region
  $region10: #{_lambda_.14} parent=0 // pred_check
    _
  $region11: #{_lambda_.14} parent=0 // pred_check_branch
    %16 = sbr.rel (0) target = $region13
  $region12: #{_lambda_.14} parent=0 // pred_region
    _
  $region13: #{_lambda_.14} parent=0 // pred_fallthru
    _
  // Predicated region
  $region14: #{_lambda_.14} parent=0 // pred_check
    _
  $region15: #{_lambda_.14} parent=0 // pred_check_branch
    %18 = sbr.rel (0) target = $region17
  $region16: #{_lambda_.14} parent=0 // pred_region
    _
  $region17: #{_lambda_.14} parent=0 // pred_fallthru
    _
  // Predicated region
  $region18: #{_lambda_.14} parent=0 // pred_check
    _
  $region19: #{_lambda_.14} parent=0 // pred_check_branch
    %20 = sbr.rel (0) target = $region21
  $region20: #{_lambda_.14} parent=0 // pred_region
    _
  $region21: #{_lambda_.14} parent=0 // pred_fallthru
    _
  // Predicated region
  $region22: #{_lambda_.14} parent=0 // pred_check
    _
  $region23: #{_lambda_.14} parent=0 // pred_check_branch
    %22 = sbr.rel (0) target = $region25
  $region24: #{_lambda_.14} parent=0 // pred_region
    _
  $region25: #{_lambda_.14} parent=0 // pred_fallthru
    _
  %v24 = vld [vmem:[%s0] sm:$0xff]
  %v25 = vld [vmem:[%s0 + $0x8] sm:$0xff]
  %v26 = vpack.c.bf16 %v25, %v24
  %v27 = vld [vmem:[%s1] sm:$0xf]
  %v28 = vld [vmem:[%s1 + $0x4] sm:$0xf]
  %v29 = vld [vmem:[%s1 + $0x8] sm:$0xf]
  %v30 = vld [vmem:[%s1 + $0xc] sm:$0xf]
  %v31 = vld [vmem:[%s2] sm:$0x1]
  %v33 = vlaneseq
  %v34 = vshrl.u32 %v33, 7
  %v35 = vsub.s32 0, %v34
  %v36 = vrot.slane %v31, %v35
  %v42 = vunpack.c.l.b16 %v27
  %v43 = vunpack.c.l.b16 %v28
  %v44 = vunpack.c.l.b16 %v29
  %v45 = vunpack.c.l.b16 %v30
  %v46 = vpack.c.b16 %v43, %v42
  %v47 = vpack.c.b16 %v45, %v44
  %vm50 = vcmask 261120
  %v52 = vsel %vm50, %v26, 0
  %54 = vmatprep.subr.bf16.mxu0 0
  %55 = vmatpush1.bf16.msra.mxu0 0
  %56 = vmatprep.subr.bf16.mxu0 0
  %57 = vmatpush1.bf16.msra.mxu0 0
  %58 = vmatprep.subr.bf16.mxu0 0
  %59 = vmatpush1.bf16.msra.mxu0 0
  %60 = vmatprep.subr.bf16.mxu0 0
  %61 = vmatpush1.bf16.msra.mxu0 0
  %62 = vmatprep.subr.bf16.mxu0 0
  %63 = vmatpush1.bf16.msra.mxu0 0
  %64 = vmatprep.subr.bf16.mxu0 0
  %65 = vmatpush1.bf16.msra.mxu0 0
  %66 = vmatprep.subr.bf16.mxu0 0
  %67 = vmatpush1.bf16.msra.mxu0 %v47
  %68 = vmatprep.subr.bf16.mxu0 0
  %69 = vmatpush1.bf16.msra.mxu0 %v46
  %70 = vmatprep.subr.bf16.mxu0 0
  %71 = vmatpush2.bf16.msra.mxu0 0
  %72 = vmatprep.subr.bf16.mxu0 0
  %73 = vmatpush2.bf16.msra.mxu0 0
  %74 = vmatprep.subr.bf16.mxu0 0
  %75 = vmatpush2.bf16.msra.mxu0 0
  %76 = vmatprep.subr.bf16.mxu0 0
  %77 = vmatpush2.bf16.msra.mxu0 0
  %78 = vmatprep.subr.bf16.mxu0 0
  %79 = vmatpush2.bf16.msra.mxu0 0
  %80 = vmatprep.subr.bf16.mxu0 0
  %81 = vmatpush2.bf16.msra.mxu0 0
  %82 = vmatprep.subr.bf16.mxu0 0
  %83 = vmatpush2.bf16.msra.mxu0 0
  %84 = vmatprep.subr.bf16.mxu0 0
  %85 = vmatpush2.bf16.msra.mxu0 0
  %86 = vmatprep.mubr.bf16.mxu0 0
  %87 = vmatmul.mubr.bf16.gmra.mxu0 %v52
  %v88 = vpop.f32.mrf.mxu0
  %v89 = vadd.f32 %v36, %v88
  %v90 = vpop.f32.mrf.mxu0
  %v91 = vpop.f32.mrf.mxu0
  %v92 = vadd.f32 %v36, %v91
  %v93 = vpop.f32.mrf.mxu0
  %94 = vdwg.mxu0
  %v95 = vld [vmem:[%s3] sm:$0xff]
  %v96 = vld [vmem:[%s3 + $0x8] sm:$0xff]
  %v97 = vadd.f32 %v89, %v95
  %v98 = vadd.f32 %v92, %v96
  %v99 = vsel %vm50, %v97, 0.0
  %100 = vadd.xlane.f32.xlu0 %v99
  %v101 = vpop.xlane.xlu0 %100
  %v102 = vsel %vm50, %v98, 0.0
  %103 = vadd.xlane.f32.xlu0 %v102
  %v104 = vpop.xlane.xlu0 %103
  %v105 = vrcp.pop 32.0
  %v106 = vmul.f32 %v101, %v105
  %v107 = vmul.f32 %v104, %v105
  %v108 = vsub.f32 %v97, %v106
  %v109 = vsub.f32 %v98, %v107
  %v110 = vmul.f32 %v108, %v108
  %v111 = vmul.f32 %v109, %v109
  %v112 = vsel %vm50, %v110, 0.0
  %113 = vadd.xlane.f32.xlu0 %v112
  %v114 = vpop.xlane.xlu0 %113
  %v115 = vsel %vm50, %v111, 0.0
  %116 = vadd.xlane.f32.xlu0 %v115
  %v117 = vpop.xlane.xlu0 %116
  %v118 = vmul.f32 %v114, %v105
  %v119 = vmul.f32 %v117, %v105
  %v120 = vadd.f32 %v118, 1e-12
  %v121 = vadd.f32 %v119, 1e-12
  %v122 = vrsqrt.pop %v120
  %v123 = vrsqrt.pop %v121
  %v124 = vmul.f32 %v108, %v122
  %v125 = vmul.f32 %v109, %v123
  %v126 = vld [vmem:[%s4] sm:$0x1]
  %v128 = vlaneseq
  %v129 = vshrl.u32 %v128, 7
  %v130 = vsub.s32 0, %v129
  %v131 = vrot.slane %v126, %v130
  %v133 = vmul.f32 %v124, %v131
  %v134 = vmul.f32 %v125, %v131
  %v135 = vld [vmem:[%s5] sm:$0x1]
  %v137 = vlaneseq
  %v138 = vshrl.u32 %v137, 7
  %v139 = vsub.s32 0, %v138
  %v140 = vrot.slane %v135, %v139
  %v142 = vadd.f32 %v133, %v140
  %v143 = vadd.f32 %v134, %v140
  %144 = vst.msk [vmem:[%s6] sm:$0xff] %vm50, %v142
  %145 = vst.msk [vmem:[%s6 + $0x8] sm:$0xff] %vm50, %v143
  // Predicated region
  $region26: #{_lambda_.14} parent=0 // pred_check
    _
  $region27: #{_lambda_.14} parent=0 // pred_check_branch
    %147 = sbr.rel (0) target = $region29
  $region28: #{_lambda_.14} parent=0 // pred_region
    _
  $region29: #{_lambda_.14} parent=0 // pred_fallthru
    _
  // Predicated region
  $region30: #{_lambda_.14} parent=0 // pred_check
    _
  $region31: #{_lambda_.14} parent=0 // pred_check_branch
    %149 = sbr.rel (0) target = $region33
  $region32: #{_lambda_.14} parent=0 // pred_region
    _
  $region33: #{_lambda_.14} parent=0 // pred_fallthru
    _

// kernel: _lambda_.15
$region0: #{_lambda_.15}
  #allocation0 [shape = 'u32[]', space=smem, size = 0x4, offset = 0x4, fixed_abs, tag = 'smem constant byte address 0x4 - core index']
  #allocation1 [shape = 'u32[144,128]{1,0:T(1,128)}', space=vmem, size = 0x12000, scoped, tag = 'internal scratch']
  %s0 = inlined_call_operand.vmem [shape: f32[16,32], index: 0, kind: input, shape index: {}]
  %s1 = inlined_call_operand.vmem [shape: bf16[32,64], index: 1, kind: input, shape index: {}]
  %s2 = inlined_call_operand.vmem [shape: f32[1,64], index: 2, kind: input, shape index: {}]
  %s3 = inlined_call_operand.vmem [shape: f32[16,64], index: 3, kind: output, shape index: {}]
  %s4 = sld [smem:[#allocation0]]
  $region22: #{_lambda_.15} parent=0
    _
  %s6 = ssub.s32 1, %s4
  %s7 = scalar_select 0, %s6, %s4
  // Predicated region
  $region2: #{_lambda_.15} parent=0 // pred_check
    _
  $region3: #{_lambda_.15} parent=0 // pred_check_branch
    %9 = sbr.rel (0) target = $region5
  $region4: #{_lambda_.15} parent=0 // pred_region
    _
  $region5: #{_lambda_.15} parent=0 // pred_fallthru
    _
  // Predicated region
  $region6: #{_lambda_.15} parent=0 // pred_check
    _
  $region7: #{_lambda_.15} parent=0 // pred_check_branch
    %11 = sbr.rel (0) target = $region9
  $region8: #{_lambda_.15} parent=0 // pred_region
    _
  $region9: #{_lambda_.15} parent=0 // pred_fallthru
    _
  // Predicated region
  $region10: #{_lambda_.15} parent=0 // pred_check
    _
  $region11: #{_lambda_.15} parent=0 // pred_check_branch
    %13 = sbr.rel (0) target = $region13
  $region12: #{_lambda_.15} parent=0 // pred_region
    _
  $region13: #{_lambda_.15} parent=0 // pred_fallthru
    _
  %v15 = vld [vmem:[%s0] sm:$0xff]
  %v16 = vld [vmem:[%s0 + $0x8] sm:$0xff]
  %v17 = vpack.c.bf16 %v16, %v15
  %v18 = vld [vmem:[%s1] sm:$0xf]
  %v19 = vld [vmem:[%s1 + $0x4] sm:$0xf]
  %v20 = vld [vmem:[%s1 + $0x8] sm:$0xf]
  %v21 = vld [vmem:[%s1 + $0xc] sm:$0xf]
  %v22 = vld [vmem:[%s2] sm:$0x1]
  %v24 = vlaneseq
  %v25 = vshrl.u32 %v24, 7
  %v26 = vsub.s32 0, %v25
  %v27 = vrot.slane %v22, %v26
  %v33 = vunpack.c.l.b16 %v18
  %v34 = vunpack.c.l.b16 %v19
  %v35 = vunpack.c.l.b16 %v20
  %v36 = vunpack.c.l.b16 %v21
  %v37 = vpack.c.b16 %v34, %v33
  %v38 = vpack.c.b16 %v36, %v35
  %vm41 = vcmask 261120
  %v43 = vsel %vm41, %v17, 0
  %45 = vmatprep.subr.bf16.mxu0 0
  %46 = vmatpush1.bf16.msra.mxu0 0
  %47 = vmatprep.subr.bf16.mxu0 0
  %48 = vmatpush1.bf16.msra.mxu0 0
  %49 = vmatprep.subr.bf16.mxu0 0
  %50 = vmatpush1.bf16.msra.mxu0 0
  %51 = vmatprep.subr.bf16.mxu0 0
  %52 = vmatpush1.bf16.msra.mxu0 0
  %53 = vmatprep.subr.bf16.mxu0 0
  %54 = vmatpush1.bf16.msra.mxu0 0
  %55 = vmatprep.subr.bf16.mxu0 0
  %56 = vmatpush1.bf16.msra.mxu0 0
  %57 = vmatprep.subr.bf16.mxu0 0
  %58 = vmatpush1.bf16.msra.mxu0 %v38
  %59 = vmatprep.subr.bf16.mxu0 0
  %60 = vmatpush1.bf16.msra.mxu0 %v37
  %61 = vmatprep.subr.bf16.mxu0 0
  %62 = vmatpush2.bf16.msra.mxu0 0
  %63 = vmatprep.subr.bf16.mxu0 0
  %64 = vmatpush2.bf16.msra.mxu0 0
  %65 = vmatprep.subr.bf16.mxu0 0
  %66 = vmatpush2.bf16.msra.mxu0 0
  %67 = vmatprep.subr.bf16.mxu0 0
  %68 = vmatpush2.bf16.msra.mxu0 0
  %69 = vmatprep.subr.bf16.mxu0 0
  %70 = vmatpush2.bf16.msra.mxu0 0
  %71 = vmatprep.subr.bf16.mxu0 0
  %72 = vmatpush2.bf16.msra.mxu0 0
  %73 = vmatprep.subr.bf16.mxu0 0
  %74 = vmatpush2.bf16.msra.mxu0 0
  %75 = vmatprep.subr.bf16.mxu0 0
  %76 = vmatpush2.bf16.msra.mxu0 0
  %77 = vmatprep.mubr.bf16.mxu0 0
  %78 = vmatmul.mubr.bf16.gmra.mxu0 %v43
  %v79 = vpop.f32.mrf.mxu0
  %v80 = vadd.f32 %v27, %v79
  %v81 = vpop.f32.mrf.mxu0
  %v82 = vpop.f32.mrf.mxu0
  %v83 = vadd.f32 %v27, %v82
  %v84 = vpop.f32.mrf.mxu0
  %85 = vdwg.mxu0
  %v86 = vmul.f32 %v80, 0.5
  %v87 = vmul.f32 %v83, 0.5
  %v88 = vmul.f32 %v80, 0.044715
  %v89 = vmul.f32 %v83, 0.044715
  %v90 = vmul.f32 %v88, %v80
  %v91 = vmul.f32 %v89, %v83
  %v92 = vmul.f32 %v90, %v80
  %v93 = vmul.f32 %v91, %v83
  %v94 = vadd.f32 %v80, %v92
  %v95 = vadd.f32 %v83, %v93
  %v96 = vmul.f32 %v94, 0.7978846
  %v97 = vmul.f32 %v95, 0.7978846
  %v98 = vtanh.pop %v96
  %v99 = vtanh.pop %v97
  %v100 = vadd.f32 %v98, 1.0
  %v101 = vadd.f32 %v99, 1.0
  %v102 = vmul.f32 %v86, %v100
  %v103 = vmul.f32 %v87, %v101
  %vm104 = vcmask 523264
  %105 = vst.msk [vmem:[%s3] sm:$0xff] %vm104, %v102
  %106 = vst.msk [vmem:[%s3 + $0x8] sm:$0xff] %vm104, %v103
  // Predicated region
  $region14: #{_lambda_.15} parent=0 // pred_check
    _
  $region15: #{_lambda_.15} parent=0 // pred_check_branch
    %108 = sbr.rel (0) target = $region17
  $region16: #{_lambda_.15} parent=0 // pred_region
    _
  $region17: #{_lambda_.15} parent=0 // pred_fallthru
    _
  // Predicated region
  $region18: #{_lambda_.15} parent=0 // pred_check
    _
  $region19: #{_lambda_.15} parent=0 // pred_check_branch
    %110 = sbr.rel (0) target = $region21
  $region20: #{_lambda_.15} parent=0 // pred_region
    _
  $region21: #{_lambda_.15} parent=0 // pred_fallthru
    _

// kernel: _lambda_.16
$region0: #{_lambda_.16}
  #allocation0 [shape = 'u32[]', space=smem, size = 0x4, offset = 0x4, fixed_abs, tag = 'smem constant byte address 0x4 - core index']
  #allocation1 [shape = 'u32[144,128]{1,0:T(1,128)}', space=vmem, size = 0x12000, scoped, tag = 'internal scratch']
  %s0 = inlined_call_operand.vmem [shape: f32[16,64], index: 0, kind: input, shape index: {}]
  %s1 = inlined_call_operand.vmem [shape: bf16[64,32], index: 1, kind: input, shape index: {}]
  %s2 = inlined_call_operand.vmem [shape: f32[1,32], index: 2, kind: input, shape index: {}]
  %s3 = inlined_call_operand.vmem [shape: f32[16,32], index: 3, kind: input, shape index: {}]
  %s4 = inlined_call_operand.vmem [shape: f32[1,32], index: 4, kind: input, shape index: {}]
  %s5 = inlined_call_operand.vmem [shape: f32[1,32], index: 5, kind: input, shape index: {}]
  %s6 = inlined_call_operand.vmem [shape: f32[16,32], index: 6, kind: output, shape index: {}]
  %s7 = sld [smem:[#allocation0]]
  $region34: #{_lambda_.16} parent=0
    _
  %s9 = ssub.s32 1, %s7
  %s10 = scalar_select 0, %s9, %s7
  // Predicated region
  $region2: #{_lambda_.16} parent=0 // pred_check
    _
  $region3: #{_lambda_.16} parent=0 // pred_check_branch
    %12 = sbr.rel (0) target = $region5
  $region4: #{_lambda_.16} parent=0 // pred_region
    _
  $region5: #{_lambda_.16} parent=0 // pred_fallthru
    _
  // Predicated region
  $region6: #{_lambda_.16} parent=0 // pred_check
    _
  $region7: #{_lambda_.16} parent=0 // pred_check_branch
    %14 = sbr.rel (0) target = $region9
  $region8: #{_lambda_.16} parent=0 // pred_region
    _
  $region9: #{_lambda_.16} parent=0 // pred_fallthru
    _
  // Predicated region
  $region10: #{_lambda_.16} parent=0 // pred_check
    _
  $region11: #{_lambda_.16} parent=0 // pred_check_branch
    %16 = sbr.rel (0) target = $region13
  $region12: #{_lambda_.16} parent=0 // pred_region
    _
  $region13: #{_lambda_.16} parent=0 // pred_fallthru
    _
  // Predicated region
  $region14: #{_lambda_.16} parent=0 // pred_check
    _
  $region15: #{_lambda_.16} parent=0 // pred_check_branch
    %18 = sbr.rel (0) target = $region17
  $region16: #{_lambda_.16} parent=0 // pred_region
    _
  $region17: #{_lambda_.16} parent=0 // pred_fallthru
    _
  // Predicated region
  $region18: #{_lambda_.16} parent=0 // pred_check
    _
  $region19: #{_lambda_.16} parent=0 // pred_check_branch
    %20 = sbr.rel (0) target = $region21
  $region20: #{_lambda_.16} parent=0 // pred_region
    _
  $region21: #{_lambda_.16} parent=0 // pred_fallthru
    _
  // Predicated region
  $region22: #{_lambda_.16} parent=0 // pred_check
    _
  $region23: #{_lambda_.16} parent=0 // pred_check_branch
    %22 = sbr.rel (0) target = $region25
  $region24: #{_lambda_.16} parent=0 // pred_region
    _
  $region25: #{_lambda_.16} parent=0 // pred_fallthru
    _
  %v24 = vld [vmem:[%s0] sm:$0xff]
  %v25 = vld [vmem:[%s0 + $0x8] sm:$0xff]
  %v26 = vpack.c.bf16 %v25, %v24
  %v27 = vld [vmem:[%s1] sm:$0xf]
  %v28 = vld [vmem:[%s1 + $0x4] sm:$0xf]
  %v29 = vld [vmem:[%s1 + $0x8] sm:$0xf]
  %v30 = vld [vmem:[%s1 + $0xc] sm:$0xf]
  %v31 = vld [vmem:[%s1 + $0x10] sm:$0xf]
  %v32 = vld [vmem:[%s1 + $0x14] sm:$0xf]
  %v33 = vld [vmem:[%s1 + $0x18] sm:$0xf]
  %v34 = vld [vmem:[%s1 + $0x1c] sm:$0xf]
  %v35 = vld [vmem:[%s2] sm:$0x1]
  %v37 = vlaneseq
  %v38 = vshrl.u32 %v37, 7
  %v39 = vsub.s32 0, %v38
  %v40 = vrot.slane %v35, %v39
  %v50 = vunpack.c.l.b16 %v27
  %v51 = vunpack.c.l.b16 %v28
  %v52 = vunpack.c.l.b16 %v29
  %v53 = vunpack.c.l.b16 %v30
  %v54 = vunpack.c.l.b16 %v31
  %v55 = vunpack.c.l.b16 %v32
  %v56 = vunpack.c.l.b16 %v33
  %v57 = vunpack.c.l.b16 %v34
  %v58 = vpack.c.b16 %v51, %v50
  %v59 = vpack.c.b16 %v53, %v52
  %v60 = vpack.c.b16 %v55, %v54
  %v61 = vpack.c.b16 %v57, %v56
  %vm66 = vcmask 523264
  %v68 = vsel %vm66, %v26, 0
  %70 = vmatprep.subr.bf16.mxu0 0
  %71 = vmatpush1.bf16.msra.mxu0 0
  %72 = vmatprep.subr.bf16.mxu0 0
  %73 = vmatpush1.bf16.msra.mxu0 0
  %74 = vmatprep.subr.bf16.mxu0 0
  %75 = vmatpush1.bf16.msra.mxu0 0
  %76 = vmatprep.subr.bf16.mxu0 0
  %77 = vmatpush1.bf16.msra.mxu0 0
  %78 = vmatprep.subr.bf16.mxu0 0
  %79 = vmatpush1.bf16.msra.mxu0 %v61
  %80 = vmatprep.subr.bf16.mxu0 0
  %81 = vmatpush1.bf16.msra.mxu0 %v60
  %82 = vmatprep.subr.bf16.mxu0 0
  %83 = vmatpush1.bf16.msra.mxu0 %v59
  %84 = vmatprep.subr.bf16.mxu0 0
  %85 = vmatpush1.bf16.msra.mxu0 %v58
  %86 = vmatprep.subr.bf16.mxu0 0
  %87 = vmatpush2.bf16.msra.mxu0 0
  %88 = vmatprep.subr.bf16.mxu0 0
  %89 = vmatpush2.bf16.msra.mxu0 0
  %90 = vmatprep.subr.bf16.mxu0 0
  %91 = vmatpush2.bf16.msra.mxu0 0
  %92 = vmatprep.subr.bf16.mxu0 0
  %93 = vmatpush2.bf16.msra.mxu0 0
  %94 = vmatprep.subr.bf16.mxu0 0
  %95 = vmatpush2.bf16.msra.mxu0 0
  %96 = vmatprep.subr.bf16.mxu0 0
  %97 = vmatpush2.bf16.msra.mxu0 0
  %98 = vmatprep.subr.bf16.mxu0 0
  %99 = vmatpush2.bf16.msra.mxu0 0
  %100 = vmatprep.subr.bf16.mxu0 0
  %101 = vmatpush2.bf16.msra.mxu0 0
  %102 = vmatprep.mubr.bf16.mxu0 0
  %103 = vmatmul.mubr.bf16.gmra.mxu0 %v68
  %v104 = vpop.f32.mrf.mxu0
  %v105 = vadd.f32 %v40, %v104
  %v106 = vpop.f32.mrf.mxu0
  %v107 = vpop.f32.mrf.mxu0
  %v108 = vadd.f32 %v40, %v107
  %v109 = vpop.f32.mrf.mxu0
  %110 = vdwg.mxu0
  %v111 = vld [vmem:[%s3] sm:$0xff]
  %v112 = vld [vmem:[%s3 + $0x8] sm:$0xff]
  %v113 = vadd.f32 %v105, %v111
  %v114 = vadd.f32 %v108, %v112
  %vm115 = vcmask 261120
  %v116 = vsel %vm115, %v113, 0.0
  %117 = vadd.xlane.f32.xlu0 %v116
  %v118 = vpop.xlane.xlu0 %117
  %v119 = vsel %vm115, %v114, 0.0
  %120 = vadd.xlane.f32.xlu0 %v119
  %v121 = vpop.xlane.xlu0 %120
  %v122 = vrcp.pop 32.0
  %v123 = vmul.f32 %v118, %v122
  %v124 = vmul.f32 %v121, %v122
  %v125 = vsub.f32 %v113, %v123
  %v126 = vsub.f32 %v114, %v124
  %v127 = vmul.f32 %v125, %v125
  %v128 = vmul.f32 %v126, %v126
  %v129 = vsel %vm115, %v127, 0.0
  %130 = vadd.xlane.f32.xlu0 %v129
  %v131 = vpop.xlane.xlu0 %130
  %v132 = vsel %vm115, %v128, 0.0
  %133 = vadd.xlane.f32.xlu0 %v132
  %v134 = vpop.xlane.xlu0 %133
  %v135 = vmul.f32 %v131, %v122
  %v136 = vmul.f32 %v134, %v122
  %v137 = vadd.f32 %v135, 1e-12
  %v138 = vadd.f32 %v136, 1e-12
  %v139 = vrsqrt.pop %v137
  %v140 = vrsqrt.pop %v138
  %v141 = vmul.f32 %v125, %v139
  %v142 = vmul.f32 %v126, %v140
  %v143 = vld [vmem:[%s4] sm:$0x1]
  %v145 = vlaneseq
  %v146 = vshrl.u32 %v145, 7
  %v147 = vsub.s32 0, %v146
  %v148 = vrot.slane %v143, %v147
  %v150 = vmul.f32 %v141, %v148
  %v151 = vmul.f32 %v142, %v148
  %v152 = vld [vmem:[%s5] sm:$0x1]
  %v154 = vlaneseq
  %v155 = vshrl.u32 %v154, 7
  %v156 = vsub.s32 0, %v155
  %v157 = vrot.slane %v152, %v156
  %v159 = vadd.f32 %v150, %v157
  %v160 = vadd.f32 %v151, %v157
  %161 = vst.msk [vmem:[%s6] sm:$0xff] %vm115, %v159
  %162 = vst.msk [vmem:[%s6 + $0x8] sm:$0xff] %vm115, %v160
  // Predicated region
  $region26: #{_lambda_.16} parent=0 // pred_check
    _
  $region27: #{_lambda_.16} parent=0 // pred_check_branch
    %164 = sbr.rel (0) target = $region29
  $region28: #{_lambda_.16} parent=0 // pred_region
    _
  $region29: #{_lambda_.16} parent=0 // pred_fallthru
    _
  // Predicated region
  $region30: #{_lambda_.16} parent=0 // pred_check
    _
  $region31: #{_lambda_.16} parent=0 // pred_check_branch
    %166 = sbr.rel (0) target = $region33
  $region32: #{_lambda_.16} parent=0 // pred_region
    _
  $region33: #{_lambda_.16} parent=0 // pred_fallthru
    _

</llo_original>
